<compile_context>
chip_gen: v7x
topology: tpu7x:2x2x1
jax: 0.10.0
libtpu: 0.0.40
codegen_flags: <defaults>
</compile_context>

<pallas_src>
from functools import partial

import jax
import jax.numpy as jnp
from jax import lax
from jax.experimental import pallas as pl
from jax.experimental.pallas import tpu as pltpu

LANE = 128


def _round_up(x, m):
    return ((x + m - 1) // m) * m


def _vmem_cap_bytes():
    """Per-core VMEM capacity; conservative fallback (v7x = 64 MiB)."""
    try:
        info = pltpu.get_tpu_info()
        cap = getattr(info, "vmem_capacity_bytes", None)
        if cap:
            return int(cap)
    except Exception:
        pass
    return 64 * 2**20


def glycan_rgcn_kernel(*refs, num_layers, b_pad, tile_n, num_unit_p):
    unit_ref, n2g_ref, invc_ref = refs[0], refs[1], refs[2]
    layer_refs = refs[3:3 + 2 * num_layers]
    node_out_ref = refs[3 + 2 * num_layers]
    graph_out_ref = refs[4 + 2 * num_layers]

    step = pl.program_id(0)

    # --- embedding fused into layer 0: onehot(unit) @ (emb @ W0) + b0 ---
    unit_ids = unit_ref[...]                                            # [tile_n, 1] i32
    u_iota = lax.broadcasted_iota(jnp.int32, (tile_n, num_unit_p), 1)
    onehot = (u_iota == unit_ids).astype(jnp.bfloat16)                  # [tile_n, Up]
    h = jnp.dot(onehot, layer_refs[0][...],
                preferred_element_type=jnp.float32) + layer_refs[1][...]
    if num_layers > 1:
        h = jnp.maximum(h, 0.0)

    # --- remaining Linear layers: ReLU on all but the last ---
    for li in range(1, num_layers):
        w_ref = layer_refs[2 * li]
        b_ref = layer_refs[2 * li + 1]
        h = jnp.dot(h.astype(jnp.bfloat16), w_ref[...],
                    preferred_element_type=jnp.float32) + b_ref[...]
        if li < num_layers - 1:
            h = jnp.maximum(h, 0.0)

    # lane-dense bf16 node-feature writeback
    node_out_ref[...] = h.astype(node_out_ref.dtype)

    # --- MeanReadout: accumulate per-graph sums directly in the resident output ---
    n2g = n2g_ref[...]                                                  # [1, tile_n] i32
    b_iota = lax.broadcasted_iota(jnp.int32, (b_pad, tile_n), 0)
    gmask = (b_iota == n2g).astype(jnp.float32)                         # [B_pad, tile_n]

    @pl.when(step == 0)
    def _():
        graph_out_ref[...] = jnp.zeros_like(graph_out_ref)

    graph_out_ref[...] += jnp.dot(gmask, h, preferred_element_type=jnp.float32)

    @pl.when(step == pl.num_programs(0) - 1)
    def _():
        graph_out_ref[...] *= invc_ref[...]                             # exact 1/count


def prepare_params(params, *, num_unit, input_dim, hidden_dims):
    """One-time padding / fusing of parameters (do NOT redo per forward)."""
    num_layers = len(hidden_dims)
    dims = [input_dim] + list(hidden_dims)
    dims_p = [_round_up(d, LANE) for d in dims]
    num_unit_p = _round_up(num_unit, LANE)

    # Fuse embedding with layer 0 (no nonlinearity between them).
    fused0 = params["emb"].astype(jnp.float32) @ params["w0"].astype(jnp.float32)
    fused0_p = jnp.zeros((num_unit_p, dims_p[1]), jnp.bfloat16)
    fused0_p = fused0_p.at[:num_unit, :dims[1]].set(fused0.astype(jnp.bfloat16))
    b0_p = jnp.zeros((1, dims_p[1]), jnp.float32)
    b0_p = b0_p.at[0, :dims[1]].set(params["b0"].astype(jnp.float32))

    layer_args = [fused0_p, b0_p]
    for li in range(1, num_layers):
        w = params[f"w{li}"]            # [dims[li], dims[li+1]]  (x @ W layout)
        b = params[f"b{li}"]            # [dims[li+1]]
        wp = jnp.zeros((dims_p[li], dims_p[li + 1]), jnp.bfloat16)
        wp = wp.at[:dims[li], :dims[li + 1]].set(w.astype(jnp.bfloat16))
        bp = jnp.zeros((1, dims_p[li + 1]), jnp.float32)
        bp = bp.at[0, :dims[li + 1]].set(b.astype(jnp.float32))
        layer_args += [wp, bp]

    return {
        "layer_args": tuple(layer_args),
        "dims_p": tuple(dims_p),
        "num_unit_p": num_unit_p,
        "num_layers": num_layers,
        "h_last": int(hidden_dims[-1]),
    }


def glycan_rgcn_forward(unit_type, node2graph, prepared, *, batch_size):
    N = int(unit_type.shape[0])
    num_layers = prepared["num_layers"]
    dims_p = prepared["dims_p"]
    num_unit_p = prepared["num_unit_p"]
    h_last = prepared["h_last"]
    h_last_p = dims_p[-1]
    layer_args = prepared["layer_args"]
    b_pad = _round_up(max(batch_size, 1), 8)

    def nbytes(a):
        return int(a.size) * a.dtype.itemsize

    weight_bytes = sum(nbytes(a) for a in layer_args)
    vmem_budget = int(0.8 * _vmem_cap_bytes())

    def resident_bytes(tn):
        act = tn * (num_unit_p * 2 + sum(dims_p) * 4)          # onehot + f32 activations
        io = 2 * (tn * 4 * 2 + tn * h_last_p * 2) + b_pad * (h_last_p + 1) * 4
        return 2 * weight_bytes + 2 * act + io + (2 << 20)     # headroom

    # Big node tile (sweep target 512-1024), bounded by the VMEM resident set.
    tile_n = min(1024, _round_up(N, 8))
    while tile_n > 8 and resident_bytes(tile_n) > vmem_budget:
        tile_n = max(8, _round_up(tile_n // 2, 8))
    n_pad = _round_up(N, tile_n)
    num_tiles = n_pad // tile_n

    # int32 index inputs (no HBM one-hot). Padded nodes get graph id == b_pad so
    # they never contribute to the readout; their feature rows are sliced off.
    unit_col = jnp.zeros((n_pad, 1), jnp.int32).at[:N, 0].set(
        unit_type.astype(jnp.int32))
    n2g_row = jnp.full((1, n_pad), b_pad, jnp.int32).at[0, :N].set(
        node2graph.astype(jnp.int32))

    # Exact per-graph inverse counts, precomputed once (no per-tile reduction).
    cnts = jax.ops.segment_sum(jnp.ones((N,), jnp.float32),
                               node2graph.astype(jnp.int32),
                               num_segments=batch_size)
    inv_cnt = jnp.zeros((b_pad, 1), jnp.float32).at[:batch_size, 0].set(
        1.0 / jnp.maximum(cnts, 1.0))

    args = (unit_col, n2g_row, inv_cnt, *layer_args)

    out_shape = (
        jax.ShapeDtypeStruct((n_pad, h_last_p), jnp.bfloat16),       # node features
        jax.ShapeDtypeStruct((b_pad, h_last_p), jnp.float32),        # graph features
    )
    out_specs = (
        pl.BlockSpec((tile_n, h_last_p), lambda i: (i, 0)),
        pl.BlockSpec((b_pad, h_last_p), lambda i: (0, 0)),           # resident accumulator
    )

    # Cost estimate for XLA scheduling.
    flops = 2 * n_pad * num_unit_p * dims_p[1]
    for li in range(1, num_layers):
        flops += 2 * n_pad * dims_p[li] * dims_p[li + 1]
    flops += 2 * b_pad * n_pad * h_last_p
    bytes_accessed = (sum(nbytes(a) for a in args)
                      + n_pad * h_last_p * 2 + b_pad * h_last_p * 4)
    cost = pl.CostEstimate(flops=int(flops), transcendentals=0,
                           bytes_accessed=int(bytes_accessed))

    vmem_limit = int(max(8 << 20, min(vmem_budget, resident_bytes(tile_n))))

    kernel = partial(glycan_rgcn_kernel, num_layers=num_layers, b_pad=b_pad,
                     tile_n=tile_n, num_unit_p=num_unit_p)

    def run(single_buffer_weights):
        def inv_spec(shape):
            # Grid-invariant blocks: no point double-buffering them.
            if single_buffer_weights:
                return pl.BlockSpec(shape, lambda i: (0, 0),
                                    pipeline_mode=pl.Buffered(1))
            return pl.BlockSpec(shape, lambda i: (0, 0))

        in_specs = [
            pl.BlockSpec((tile_n, 1), lambda i: (i, 0)),
            pl.BlockSpec((1, tile_n), lambda i: (0, i)),
            inv_spec((b_pad, 1)),
            inv_spec((num_unit_p, dims_p[1])),
            inv_spec((1, dims_p[1])),
        ]
        for li in range(1, num_layers):
            in_specs.append(inv_spec((dims_p[li], dims_p[li + 1])))
            in_specs.append(inv_spec((1, dims_p[li + 1])))

        return pl.pallas_call(
            kernel,
            out_shape=out_shape,
            grid_spec=pltpu.PrefetchScalarGridSpec(
                num_scalar_prefetch=0,
                grid=(num_tiles,),
                in_specs=in_specs,
                out_specs=out_specs,
                scratch_shapes=[]),
            compiler_params=pltpu.CompilerParams(
                dimension_semantics=("arbitrary",),   # readout reduces over node tiles
                vmem_limit_bytes=vmem_limit),
            cost_estimate=cost,
        )(*args)

    try:
        node_pad, graph_pad = run(True)
    except Exception:
        # Fallback if this jax version rejects pipeline_mode=pl.Buffered(1).
        node_pad, graph_pad = run(False)

    return {
        "graph_feature": graph_pad[:batch_size, :h_last],
        "node_feature": node_pad[:N, :h_last],
    }


def init_params(key, *, num_unit, input_dim, hidden_dims):
    """Synthetic parameters matching GlycanRGCN shapes (Linear stored as [in, out])."""
    dims = [input_dim] + list(hidden_dims)
    keys = jax.random.split(key, 1 + 2 * len(hidden_dims))
    params = {"emb": jax.random.normal(keys[0], (num_unit, input_dim),
                                       jnp.float32) * 0.1}
    for li in range(len(hidden_dims)):
        fan_in = float(dims[li])
        params[f"w{li}"] = (jax.random.normal(keys[1 + 2 * li],
                                              (dims[li], dims[li + 1]), jnp.float32)
                            / jnp.sqrt(fan_in))
        params[f"b{li}"] = (jax.random.normal(keys[2 + 2 * li],
                                              (dims[li + 1],), jnp.float32)
                            / jnp.sqrt(fan_in))
    return params


def reference_forward(unit_type, node2graph, params, *, hidden_dims, batch_size):
    """Pure-JAX f32 reference of GlycanRGCN.forward (default ctor flags)."""
    num_layers = len(hidden_dims)
    h = params["emb"][unit_type]
    for li in range(num_layers):
        h = h @ params[f"w{li}"] + params[f"b{li}"]
        if li < num_layers - 1:
            h = jnp.maximum(h, 0.0)
    node_feature = h
    sums = jax.ops.segment_sum(node_feature, node2graph, num_segments=batch_size)
    cnts = jax.ops.segment_sum(jnp.ones((unit_type.shape[0],), jnp.float32),
                               node2graph, num_segments=batch_size)
    graph_feature = sums / jnp.maximum(cnts, 1.0)[:, None]
    return graph_feature, node_feature


if __name__ == "__main__":
    INPUT_DIM = 32
    HIDDEN_DIMS = [32, 32, 32]
    NUM_UNIT = 16
    N_NODES = 8
    BATCH_SIZE = 2
    # num_relation / relation_embedding exist in __init__ but are unused by forward.

    key = jax.random.PRNGKey(0)
    k_params, k_units = jax.random.split(key)
    params = init_params(k_params, num_unit=NUM_UNIT, input_dim=INPUT_DIM,
                         hidden_dims=HIDDEN_DIMS)
    unit_type = jax.random.randint(k_units, (N_NODES,), 0, NUM_UNIT,
                                   dtype=jnp.int32)
    node2graph = jnp.array([0, 0, 0, 0, 0, 1, 1, 1], dtype=jnp.int32)

    prepared = prepare_params(params, num_unit=NUM_UNIT, input_dim=INPUT_DIM,
                              hidden_dims=HIDDEN_DIMS)
    out = glycan_rgcn_forward(unit_type, node2graph, prepared,
                              batch_size=BATCH_SIZE)
    out = jax.block_until_ready(out)

    gf, nf = out["graph_feature"], out["node_feature"]
    assert gf.shape == (BATCH_SIZE, HIDDEN_DIMS[-1])
    assert nf.shape == (N_NODES, HIDDEN_DIMS[-1])
    assert bool(jnp.all(jnp.isfinite(gf))) and bool(jnp.all(jnp.isfinite(nf)))

    gf_ref, nf_ref = reference_forward(unit_type, node2graph, params,
                                       hidden_dims=HIDDEN_DIMS,
                                       batch_size=BATCH_SIZE)
    # bf16 weights/activations with f32 accumulation bound accuracy to ~1e-2 rel.
    assert bool(jnp.allclose(nf.astype(jnp.float32), nf_ref,
                             atol=5e-2, rtol=5e-2)), "node_feature mismatch"
    assert bool(jnp.allclose(gf, gf_ref, atol=5e-2, rtol=5e-2)), "graph_feature mismatch"
    print("KERNEL_OK")
</pallas_src>

<mosaic_0001>
module attributes {stable_mosaic.version = 11 : i64} {
  func.func @glycan_rgcn_kernel(%arg0: i32, %arg1: memref<8x1xi32, #tpu.memory_space<vmem>>, %arg2: memref<1x8xi32, #tpu.memory_space<vmem>>, %arg3: memref<8x1xf32, #tpu.memory_space<vmem>>, %arg4: memref<128x128xbf16, #tpu.memory_space<vmem>>, %arg5: memref<1x128xf32, #tpu.memory_space<vmem>>, %arg6: memref<128x128xbf16, #tpu.memory_space<vmem>>, %arg7: memref<1x128xf32, #tpu.memory_space<vmem>>, %arg8: memref<128x128xbf16, #tpu.memory_space<vmem>>, %arg9: memref<1x128xf32, #tpu.memory_space<vmem>>, %arg10: memref<8x128xbf16, #tpu.memory_space<vmem>>, %arg11: memref<8x128xf32, #tpu.memory_space<vmem>>) attributes {dimension_semantics = [#tpu.dimension_semantics<arbitrary>], iteration_bounds = array<i64: 1>, scalar_prefetch = 0 : i64, scratch_operands = 0 : i64, tpu.core_type = #tpu.core_type<tc>, window_params = [{transform_indices = @transform_0, window_bounds = array<i64: 8, 1>}, {transform_indices = @transform_1, window_bounds = array<i64: 1, 8>}, {pipeline_mode = #tpu.pipeline_mode<synchronous>, transform_indices = @transform_2, window_bounds = array<i64: 8, 1>}, {pipeline_mode = #tpu.pipeline_mode<synchronous>, transform_indices = @transform_3, window_bounds = array<i64: 128, 128>}, {pipeline_mode = #tpu.pipeline_mode<synchronous>, transform_indices = @transform_4, window_bounds = array<i64: 1, 128>}, {pipeline_mode = #tpu.pipeline_mode<synchronous>, transform_indices = @transform_5, window_bounds = array<i64: 128, 128>}, {pipeline_mode = #tpu.pipeline_mode<synchronous>, transform_indices = @transform_6, window_bounds = array<i64: 1, 128>}, {pipeline_mode = #tpu.pipeline_mode<synchronous>, transform_indices = @transform_7, window_bounds = array<i64: 128, 128>}, {pipeline_mode = #tpu.pipeline_mode<synchronous>, transform_indices = @transform_8, window_bounds = array<i64: 1, 128>}, {transform_indices = @transform_9, window_bounds = array<i64: 8, 128>}, {pipeline_mode = #tpu.pipeline_mode<synchronous>, transform_indices = @transform_10, window_bounds = array<i64: 8, 128>}]} {
    %c0 = arith.constant 0 : index
    %c0_0 = arith.constant 0 : index
    %0 = vector.load %arg1[%c0, %c0_0] : memref<8x1xi32, #tpu.memory_space<vmem>>, vector<8x1xi32>
    %1 = tpu.iota {dimensions = array<i32: 1>} : vector<8x128xi32>
    %2 = vector.broadcast %0 : vector<8x1xi32> to vector<8x128xi32>
    %3 = arith.cmpi eq, %1, %2 : vector<8x128xi32>
    %4 = arith.extui %3 : vector<8x128xi1> to vector<8x128xi32>
    %5 = arith.sitofp %4 : vector<8x128xi32> to vector<8x128xf32>
    %6 = arith.truncf %5 : vector<8x128xf32> to vector<8x128xbf16>
    %c0_1 = arith.constant 0 : index
    %c0_2 = arith.constant 0 : index
    %7 = vector.load %arg4[%c0_1, %c0_2] : memref<128x128xbf16, #tpu.memory_space<vmem>>, vector<128x128xbf16>
    %cst = arith.constant dense<0.000000e+00> : vector<8x128xf32>
    %8 = tpu.matmul %6, %7, %cst {dimension_numbers = #tpu.dot_dimension_numbers<[1], [0], [0], [1], [0, 0, 1, 1], [], []>} : vector<8x128xbf16>, vector<128x128xbf16>, vector<8x128xf32> -> vector<8x128xf32>
    %c0_3 = arith.constant 0 : index
    %c0_4 = arith.constant 0 : index
    %9 = vector.load %arg5[%c0_3, %c0_4] : memref<1x128xf32, #tpu.memory_space<vmem>>, vector<1x128xf32>
    %10 = vector.broadcast %9 : vector<1x128xf32> to vector<8x128xf32>
    %11 = arith.addf %8, %10 : vector<8x128xf32>
    %cst_5 = arith.constant 0.000000e+00 : f32
    %12 = vector.broadcast %cst_5 : f32 to vector<8x128xf32>
    %13 = arith.maximumf %11, %12 : vector<8x128xf32>
    %14 = arith.truncf %13 : vector<8x128xf32> to vector<8x128xbf16>
    %c0_6 = arith.constant 0 : index
    %c0_7 = arith.constant 0 : index
    %15 = vector.load %arg6[%c0_6, %c0_7] : memref<128x128xbf16, #tpu.memory_space<vmem>>, vector<128x128xbf16>
    %cst_8 = arith.constant dense<0.000000e+00> : vector<8x128xf32>
    %16 = tpu.matmul %14, %15, %cst_8 {dimension_numbers = #tpu.dot_dimension_numbers<[1], [0], [0], [1], [0, 0, 1, 1], [], []>} : vector<8x128xbf16>, vector<128x128xbf16>, vector<8x128xf32> -> vector<8x128xf32>
    %c0_9 = arith.constant 0 : index
    %c0_10 = arith.constant 0 : index
    %17 = vector.load %arg7[%c0_9, %c0_10] : memref<1x128xf32, #tpu.memory_space<vmem>>, vector<1x128xf32>
    %18 = vector.broadcast %17 : vector<1x128xf32> to vector<8x128xf32>
    %19 = arith.addf %16, %18 : vector<8x128xf32>
    %cst_11 = arith.constant 0.000000e+00 : f32
    %20 = vector.broadcast %cst_11 : f32 to vector<8x128xf32>
    %21 = arith.maximumf %19, %20 : vector<8x128xf32>
    %22 = arith.truncf %21 : vector<8x128xf32> to vector<8x128xbf16>
    %c0_12 = arith.constant 0 : index
    %c0_13 = arith.constant 0 : index
    %23 = vector.load %arg8[%c0_12, %c0_13] : memref<128x128xbf16, #tpu.memory_space<vmem>>, vector<128x128xbf16>
    %cst_14 = arith.constant dense<0.000000e+00> : vector<8x128xf32>
    %24 = tpu.matmul %22, %23, %cst_14 {dimension_numbers = #tpu.dot_dimension_numbers<[1], [0], [0], [1], [0, 0, 1, 1], [], []>} : vector<8x128xbf16>, vector<128x128xbf16>, vector<8x128xf32> -> vector<8x128xf32>
    %c0_15 = arith.constant 0 : index
    %c0_16 = arith.constant 0 : index
    %25 = vector.load %arg9[%c0_15, %c0_16] : memref<1x128xf32, #tpu.memory_space<vmem>>, vector<1x128xf32>
    %26 = vector.broadcast %25 : vector<1x128xf32> to vector<8x128xf32>
    %27 = arith.addf %24, %26 : vector<8x128xf32>
    %28 = arith.truncf %27 : vector<8x128xf32> to vector<8x128xbf16>
    %c0_17 = arith.constant 0 : index
    %c0_18 = arith.constant 0 : index
    %29 = vector.load %arg10[%c0_17, %c0_18] : memref<8x128xbf16, #tpu.memory_space<vmem>>, vector<8x128xbf16>
    tpu.vector_store %arg10[%c0_17, %c0_18], %28 {strides = array<i32>} : memref<8x128xbf16, #tpu.memory_space<vmem>>, vector<8x128xbf16>,
    %c0_19 = arith.constant 0 : index
    %c0_20 = arith.constant 0 : index
    %30 = vector.load %arg2[%c0_19, %c0_20] : memref<1x8xi32, #tpu.memory_space<vmem>>, vector<1x8xi32>
    %31 = tpu.iota {dimensions = array<i32: 0>} : vector<8x8xi32>
    %32 = vector.broadcast %30 : vector<1x8xi32> to vector<8x8xi32>
    %33 = arith.cmpi eq, %31, %32 : vector<8x8xi32>
    %34 = arith.extui %33 : vector<8x8xi1> to vector<8x8xi32>
    %35 = arith.sitofp %34 : vector<8x8xi32> to vector<8x8xf32>
    %c0_i32 = arith.constant 0 : i32
    %36 = arith.cmpi eq, %arg0, %c0_i32 : i32
    %37 = arith.extui %36 : i1 to i32
    %c0_i32_21 = arith.constant 0 : i32
    %38 = arith.cmpi ne, %37, %c0_i32_21 : i32
    scf.if %38 {
      %cst_29 = arith.constant 0.000000e+00 : f32
      %46 = vector.broadcast %cst_29 : f32 to vector<8x128xf32>
      %c0_30 = arith.constant 0 : index
      %c0_31 = arith.constant 0 : index
      %47 = vector.load %arg11[%c0_30, %c0_31] : memref<8x128xf32, #tpu.memory_space<vmem>>, vector<8x128xf32>
      tpu.vector_store %arg11[%c0_30, %c0_31], %46 {strides = array<i32>} : memref<8x128xf32, #tpu.memory_space<vmem>>, vector<8x128xf32>,
    } else {
    }
    %c0_22 = arith.constant 0 : index
    %c0_23 = arith.constant 0 : index
    %39 = vector.load %arg11[%c0_22, %c0_23] : memref<8x128xf32, #tpu.memory_space<vmem>>, vector<8x128xf32>
    %cst_24 = arith.constant dense<0.000000e+00> : vector<8x128xf32>
    %40 = tpu.matmul %35, %27, %cst_24 {dimension_numbers = #tpu.dot_dimension_numbers<[1], [0], [0], [1], [0, 0, 1, 1], [], []>} : vector<8x8xf32>, vector<8x128xf32>, vector<8x128xf32> -> vector<8x128xf32>
    %41 = arith.addf %39, %40 : vector<8x128xf32>
    %c0_25 = arith.constant 0 : index
    %c0_26 = arith.constant 0 : index
    %42 = vector.load %arg11[%c0_25, %c0_26] : memref<8x128xf32, #tpu.memory_space<vmem>>, vector<8x128xf32>
    tpu.vector_store %arg11[%c0_25, %c0_26], %41 {strides = array<i32>} : memref<8x128xf32, #tpu.memory_space<vmem>>, vector<8x128xf32>,
    %c0_i32_27 = arith.constant 0 : i32
    %43 = arith.cmpi eq, %arg0, %c0_i32_27 : i32
    %44 = arith.extui %43 : i1 to i32
    %c0_i32_28 = arith.constant 0 : i32
    %45 = arith.cmpi ne, %44, %c0_i32_28 : i32
    scf.if %45 {
      %c0_29 = arith.constant 0 : index
      %c0_30 = arith.constant 0 : index
      %46 = vector.load %arg11[%c0_29, %c0_30] : memref<8x128xf32, #tpu.memory_space<vmem>>, vector<8x128xf32>
      %c0_31 = arith.constant 0 : index
      %c0_32 = arith.constant 0 : index
      %47 = vector.load %arg3[%c0_31, %c0_32] : memref<8x1xf32, #tpu.memory_space<vmem>>, vector<8x1xf32>
      %48 = vector.broadcast %47 : vector<8x1xf32> to vector<8x128xf32>
      %49 = arith.mulf %46, %48 : vector<8x128xf32>
      %c0_33 = arith.constant 0 : index
      %c0_34 = arith.constant 0 : index
      %50 = vector.load %arg11[%c0_33, %c0_34] : memref<8x128xf32, #tpu.memory_space<vmem>>, vector<8x128xf32>
      tpu.vector_store %arg11[%c0_33, %c0_34], %49 {strides = array<i32>} : memref<8x128xf32, #tpu.memory_space<vmem>>, vector<8x128xf32>,
    } else {
    }
    return
  }
  func.func @transform_0(%arg0: i32) -> (i32, i32) {
    %c0_i32 = arith.constant 0 : i32
    %c0_i32_0 = arith.constant 0 : i32
    return %arg0, %c0_i32 : i32, i32
  }
  func.func @transform_1(%arg0: i32) -> (i32, i32) {
    %c0_i32 = arith.constant 0 : i32
    %c0_i32_0 = arith.constant 0 : i32
    return %c0_i32, %arg0 : i32, i32
  }
  func.func @transform_2(%arg0: i32) -> (i32, i32) {
    %c0_i32 = arith.constant 0 : i32
    %c0_i32_0 = arith.constant 0 : i32
    %c0_i32_1 = arith.constant 0 : i32
    return %c0_i32, %c0_i32_0 : i32, i32
  }
  func.func @transform_3(%arg0: i32) -> (i32, i32) {
    %c0_i32 = arith.constant 0 : i32
    %c0_i32_0 = arith.constant 0 : i32
    %c0_i32_1 = arith.constant 0 : i32
    return %c0_i32, %c0_i32_0 : i32, i32
  }
  func.func @transform_4(%arg0: i32) -> (i32, i32) {
    %c0_i32 = arith.constant 0 : i32
    %c0_i32_0 = arith.constant 0 : i32
    %c0_i32_1 = arith.constant 0 : i32
    return %c0_i32, %c0_i32_0 : i32, i32
  }
  func.func @transform_5(%arg0: i32) -> (i32, i32) {
    %c0_i32 = arith.constant 0 : i32
    %c0_i32_0 = arith.constant 0 : i32
    %c0_i32_1 = arith.constant 0 : i32
    return %c0_i32, %c0_i32_0 : i32, i32
  }
  func.func @transform_6(%arg0: i32) -> (i32, i32) {
    %c0_i32 = arith.constant 0 : i32
    %c0_i32_0 = arith.constant 0 : i32
    %c0_i32_1 = arith.constant 0 : i32
    return %c0_i32, %c0_i32_0 : i32, i32
  }
  func.func @transform_7(%arg0: i32) -> (i32, i32) {
    %c0_i32 = arith.constant 0 : i32
    %c0_i32_0 = arith.constant 0 : i32
    %c0_i32_1 = arith.constant 0 : i32
    return %c0_i32, %c0_i32_0 : i32, i32
  }
  func.func @transform_8(%arg0: i32) -> (i32, i32) {
    %c0_i32 = arith.constant 0 : i32
    %c0_i32_0 = arith.constant 0 : i32
    %c0_i32_1 = arith.constant 0 : i32
    return %c0_i32, %c0_i32_0 : i32, i32
  }
  func.func @transform_9(%arg0: i32) -> (i32, i32) {
    %c0_i32 = arith.constant 0 : i32
    %c0_i32_0 = arith.constant 0 : i32
    return %arg0, %c0_i32 : i32, i32
  }
  func.func @transform_10(%arg0: i32) -> (i32, i32) {
    %c0_i32 = arith.constant 0 : i32
    %c0_i32_0 = arith.constant 0 : i32
    %c0_i32_1 = arith.constant 0 : i32
    return %c0_i32, %c0_i32_0 : i32, i32
  }
}

module attributes {stable_mosaic.version = 11 : i64} {
  func.func @glycan_rgcn_kernel(%arg0: i32, %arg1: memref<8x1xi32, #tpu.memory_space<vmem>>, %arg2: memref<1x8xi32, #tpu.memory_space<vmem>>, %arg3: memref<8x1xf32, #tpu.memory_space<vmem>>, %arg4: memref<128x128xbf16, #tpu.memory_space<vmem>>, %arg5: memref<1x128xf32, #tpu.memory_space<vmem>>, %arg6: memref<128x128xbf16, #tpu.memory_space<vmem>>, %arg7: memref<1x128xf32, #tpu.memory_space<vmem>>, %arg8: memref<128x128xbf16, #tpu.memory_space<vmem>>, %arg9: memref<1x128xf32, #tpu.memory_space<vmem>>, %arg10: memref<8x128xbf16, #tpu.memory_space<vmem>>, %arg11: memref<8x128xf32, #tpu.memory_space<vmem>>) attributes {dimension_semantics = [#tpu.dimension_semantics<arbitrary>], iteration_bounds = array<i64: 1>, scalar_prefetch = 0 : i64, scratch_operands = 0 : i64, tpu.core_type = #tpu.core_type<tc>, window_params = [{transform_indices = @transform_0, window_bounds = array<i64: 8, 1>}, {transform_indices = @transform_1, window_bounds = array<i64: 1, 8>}, {pipeline_mode = #tpu.pipeline_mode<synchronous>, transform_indices = @transform_2, window_bounds = array<i64: 8, 1>}, {pipeline_mode = #tpu.pipeline_mode<synchronous>, transform_indices = @transform_3, window_bounds = array<i64: 128, 128>}, {pipeline_mode = #tpu.pipeline_mode<synchronous>, transform_indices = @transform_4, window_bounds = array<i64: 1, 128>}, {pipeline_mode = #tpu.pipeline_mode<synchronous>, transform_indices = @transform_5, window_bounds = array<i64: 128, 128>}, {pipeline_mode = #tpu.pipeline_mode<synchronous>, transform_indices = @transform_6, window_bounds = array<i64: 1, 128>}, {pipeline_mode = #tpu.pipeline_mode<synchronous>, transform_indices = @transform_7, window_bounds = array<i64: 128, 128>}, {pipeline_mode = #tpu.pipeline_mode<synchronous>, transform_indices = @transform_8, window_bounds = array<i64: 1, 128>}, {transform_indices = @transform_9, window_bounds = array<i64: 8, 128>}, {pipeline_mode = #tpu.pipeline_mode<synchronous>, transform_indices = @transform_10, window_bounds = array<i64: 8, 128>}]} {
    %c0 = arith.constant 0 : index
    %c0_0 = arith.constant 0 : index
    %0 = vector.load %arg1[%c0, %c0_0] : memref<8x1xi32, #tpu.memory_space<vmem>>, vector<8x1xi32>
    %1 = tpu.iota {dimensions = array<i32: 1>} : vector<8x128xi32>
    %2 = vector.broadcast %0 : vector<8x1xi32> to vector<8x128xi32>
    %3 = arith.cmpi eq, %1, %2 : vector<8x128xi32>
    %4 = arith.extui %3 : vector<8x128xi1> to vector<8x128xi32>
    %5 = arith.sitofp %4 : vector<8x128xi32> to vector<8x128xf32>
    %6 = arith.truncf %5 : vector<8x128xf32> to vector<8x128xbf16>
    %c0_1 = arith.constant 0 : index
    %c0_2 = arith.constant 0 : index
    %7 = vector.load %arg4[%c0_1, %c0_2] : memref<128x128xbf16, #tpu.memory_space<vmem>>, vector<128x128xbf16>
    %cst = arith.constant dense<0.000000e+00> : vector<8x128xf32>
    %8 = tpu.matmul %6, %7, %cst {dimension_numbers = #tpu.dot_dimension_numbers<[1], [0], [0], [1], [0, 0, 1, 1], [], []>} : vector<8x128xbf16>, vector<128x128xbf16>, vector<8x128xf32> -> vector<8x128xf32>
    %c0_3 = arith.constant 0 : index
    %c0_4 = arith.constant 0 : index
    %9 = vector.load %arg5[%c0_3, %c0_4] : memref<1x128xf32, #tpu.memory_space<vmem>>, vector<1x128xf32>
    %10 = vector.broadcast %9 : vector<1x128xf32> to vector<8x128xf32>
    %11 = arith.addf %8, %10 : vector<8x128xf32>
    %cst_5 = arith.constant 0.000000e+00 : f32
    %12 = vector.broadcast %cst_5 : f32 to vector<8x128xf32>
    %13 = arith.maximumf %11, %12 : vector<8x128xf32>
    %14 = arith.truncf %13 : vector<8x128xf32> to vector<8x128xbf16>
    %c0_6 = arith.constant 0 : index
    %c0_7 = arith.constant 0 : index
    %15 = vector.load %arg6[%c0_6, %c0_7] : memref<128x128xbf16, #tpu.memory_space<vmem>>, vector<128x128xbf16>
    %cst_8 = arith.constant dense<0.000000e+00> : vector<8x128xf32>
    %16 = tpu.matmul %14, %15, %cst_8 {dimension_numbers = #tpu.dot_dimension_numbers<[1], [0], [0], [1], [0, 0, 1, 1], [], []>} : vector<8x128xbf16>, vector<128x128xbf16>, vector<8x128xf32> -> vector<8x128xf32>
    %c0_9 = arith.constant 0 : index
    %c0_10 = arith.constant 0 : index
    %17 = vector.load %arg7[%c0_9, %c0_10] : memref<1x128xf32, #tpu.memory_space<vmem>>, vector<1x128xf32>
    %18 = vector.broadcast %17 : vector<1x128xf32> to vector<8x128xf32>
    %19 = arith.addf %16, %18 : vector<8x128xf32>
    %cst_11 = arith.constant 0.000000e+00 : f32
    %20 = vector.broadcast %cst_11 : f32 to vector<8x128xf32>
    %21 = arith.maximumf %19, %20 : vector<8x128xf32>
    %22 = arith.truncf %21 : vector<8x128xf32> to vector<8x128xbf16>
    %c0_12 = arith.constant 0 : index
    %c0_13 = arith.constant 0 : index
    %23 = vector.load %arg8[%c0_12, %c0_13] : memref<128x128xbf16, #tpu.memory_space<vmem>>, vector<128x128xbf16>
    %cst_14 = arith.constant dense<0.000000e+00> : vector<8x128xf32>
    %24 = tpu.matmul %22, %23, %cst_14 {dimension_numbers = #tpu.dot_dimension_numbers<[1], [0], [0], [1], [0, 0, 1, 1], [], []>} : vector<8x128xbf16>, vector<128x128xbf16>, vector<8x128xf32> -> vector<8x128xf32>
    %c0_15 = arith.constant 0 : index
    %c0_16 = arith.constant 0 : index
    %25 = vector.load %arg9[%c0_15, %c0_16] : memref<1x128xf32, #tpu.memory_space<vmem>>, vector<1x128xf32>
    %26 = vector.broadcast %25 : vector<1x128xf32> to vector<8x128xf32>
    %27 = arith.addf %24, %26 : vector<8x128xf32>
    %28 = arith.truncf %27 : vector<8x128xf32> to vector<8x128xbf16>
    %c0_17 = arith.constant 0 : index
    %c0_18 = arith.constant 0 : index
    %29 = vector.load %arg10[%c0_17, %c0_18] : memref<8x128xbf16, #tpu.memory_space<vmem>>, vector<8x128xbf16>
    tpu.vector_store %arg10[%c0_17, %c0_18], %28 {strides = array<i32>} : memref<8x128xbf16, #tpu.memory_space<vmem>>, vector<8x128xbf16>,
    %c0_19 = arith.constant 0 : index
    %c0_20 = arith.constant 0 : index
    %30 = vector.load %arg2[%c0_19, %c0_20] : memref<1x8xi32, #tpu.memory_space<vmem>>, vector<1x8xi32>
    %31 = tpu.iota {dimensions = array<i32: 0>} : vector<8x8xi32>
    %32 = vector.broadcast %30 : vector<1x8xi32> to vector<8x8xi32>
    %33 = arith.cmpi eq, %31, %32 : vector<8x8xi32>
    %34 = arith.extui %33 : vector<8x8xi1> to vector<8x8xi32>
    %35 = arith.sitofp %34 : vector<8x8xi32> to vector<8x8xf32>
    %c0_i32 = arith.constant 0 : i32
    %36 = arith.cmpi eq, %arg0, %c0_i32 : i32
    %37 = arith.extui %36 : i1 to i32
    %c0_i32_21 = arith.constant 0 : i32
    %38 = arith.cmpi ne, %37, %c0_i32_21 : i32
    scf.if %38 {
      %cst_29 = arith.constant 0.000000e+00 : f32
      %46 = vector.broadcast %cst_29 : f32 to vector<8x128xf32>
      %c0_30 = arith.constant 0 : index
      %c0_31 = arith.constant 0 : index
      %47 = vector.load %arg11[%c0_30, %c0_31] : memref<8x128xf32, #tpu.memory_space<vmem>>, vector<8x128xf32>
      tpu.vector_store %arg11[%c0_30, %c0_31], %46 {strides = array<i32>} : memref<8x128xf32, #tpu.memory_space<vmem>>, vector<8x128xf32>,
    } else {
    }
    %c0_22 = arith.constant 0 : index
    %c0_23 = arith.constant 0 : index
    %39 = vector.load %arg11[%c0_22, %c0_23] : memref<8x128xf32, #tpu.memory_space<vmem>>, vector<8x128xf32>
    %cst_24 = arith.constant dense<0.000000e+00> : vector<8x128xf32>
    %40 = tpu.matmul %35, %27, %cst_24 {dimension_numbers = #tpu.dot_dimension_numbers<[1], [0], [0], [1], [0, 0, 1, 1], [], []>} : vector<8x8xf32>, vector<8x128xf32>, vector<8x128xf32> -> vector<8x128xf32>
    %41 = arith.addf %39, %40 : vector<8x128xf32>
    %c0_25 = arith.constant 0 : index
    %c0_26 = arith.constant 0 : index
    %42 = vector.load %arg11[%c0_25, %c0_26] : memref<8x128xf32, #tpu.memory_space<vmem>>, vector<8x128xf32>
    tpu.vector_store %arg11[%c0_25, %c0_26], %41 {strides = array<i32>} : memref<8x128xf32, #tpu.memory_space<vmem>>, vector<8x128xf32>,
    %c0_i32_27 = arith.constant 0 : i32
    %43 = arith.cmpi eq, %arg0, %c0_i32_27 : i32
    %44 = arith.extui %43 : i1 to i32
    %c0_i32_28 = arith.constant 0 : i32
    %45 = arith.cmpi ne, %44, %c0_i32_28 : i32
    scf.if %45 {
      %c0_29 = arith.constant 0 : index
      %c0_30 = arith.constant 0 : index
      %46 = vector.load %arg11[%c0_29, %c0_30] : memref<8x128xf32, #tpu.memory_space<vmem>>, vector<8x128xf32>
      %c0_31 = arith.constant 0 : index
      %c0_32 = arith.constant 0 : index
      %47 = vector.load %arg3[%c0_31, %c0_32] : memref<8x1xf32, #tpu.memory_space<vmem>>, vector<8x1xf32>
      %48 = vector.broadcast %47 : vector<8x1xf32> to vector<8x128xf32>
      %49 = arith.mulf %46, %48 : vector<8x128xf32>
      %c0_33 = arith.constant 0 : index
      %c0_34 = arith.constant 0 : index
      %50 = vector.load %arg11[%c0_33, %c0_34] : memref<8x128xf32, #tpu.memory_space<vmem>>, vector<8x128xf32>
      tpu.vector_store %arg11[%c0_33, %c0_34], %49 {strides = array<i32>} : memref<8x128xf32, #tpu.memory_space<vmem>>, vector<8x128xf32>,
    } else {
    }
    return
  }
  func.func @transform_0(%arg0: i32) -> (i32, i32) {
    %c0_i32 = arith.constant 0 : i32
    %c0_i32_0 = arith.constant 0 : i32
    return %arg0, %c0_i32 : i32, i32
  }
  func.func @transform_1(%arg0: i32) -> (i32, i32) {
    %c0_i32 = arith.constant 0 : i32
    %c0_i32_0 = arith.constant 0 : i32
    return %c0_i32, %arg0 : i32, i32
  }
  func.func @transform_2(%arg0: i32) -> (i32, i32) {
    %c0_i32 = arith.constant 0 : i32
    %c0_i32_0 = arith.constant 0 : i32
    %c0_i32_1 = arith.constant 0 : i32
    return %c0_i32, %c0_i32_0 : i32, i32
  }
  func.func @transform_3(%arg0: i32) -> (i32, i32) {
    %c0_i32 = arith.constant 0 : i32
    %c0_i32_0 = arith.constant 0 : i32
    %c0_i32_1 = arith.constant 0 : i32
    return %c0_i32, %c0_i32_0 : i32, i32
  }
  func.func @transform_4(%arg0: i32) -> (i32, i32) {
    %c0_i32 = arith.constant 0 : i32
    %c0_i32_0 = arith.constant 0 : i32
    %c0_i32_1 = arith.constant 0 : i32
    return %c0_i32, %c0_i32_0 : i32, i32
  }
  func.func @transform_5(%arg0: i32) -> (i32, i32) {
    %c0_i32 = arith.constant 0 : i32
    %c0_i32_0 = arith.constant 0 : i32
    %c0_i32_1 = arith.constant 0 : i32
    return %c0_i32, %c0_i32_0 : i32, i32
  }
  func.func @transform_6(%arg0: i32) -> (i32, i32) {
    %c0_i32 = arith.constant 0 : i32
    %c0_i32_0 = arith.constant 0 : i32
    %c0_i32_1 = arith.constant 0 : i32
    return %c0_i32, %c0_i32_0 : i32, i32
  }
  func.func @transform_7(%arg0: i32) -> (i32, i32) {
    %c0_i32 = arith.constant 0 : i32
    %c0_i32_0 = arith.constant 0 : i32
    %c0_i32_1 = arith.constant 0 : i32
    return %c0_i32, %c0_i32_0 : i32, i32
  }
  func.func @transform_8(%arg0: i32) -> (i32, i32) {
    %c0_i32 = arith.constant 0 : i32
    %c0_i32_0 = arith.constant 0 : i32
    %c0_i32_1 = arith.constant 0 : i32
    return %c0_i32, %c0_i32_0 : i32, i32
  }
  func.func @transform_9(%arg0: i32) -> (i32, i32) {
    %c0_i32 = arith.constant 0 : i32
    %c0_i32_0 = arith.constant 0 : i32
    return %arg0, %c0_i32 : i32, i32
  }
  func.func @transform_10(%arg0: i32) -> (i32, i32) {
    %c0_i32 = arith.constant 0 : i32
    %c0_i32_0 = arith.constant 0 : i32
    %c0_i32_1 = arith.constant 0 : i32
    return %c0_i32, %c0_i32_0 : i32, i32
  }
}

</mosaic_0001>

<llo_original>
// kernel: tpu_custom_call.1
$region0: #{tpu_custom_call.1}
  #allocation0 [shape = 'u32[]', space=smem, size = 0x4, offset = 0x4, fixed_abs, tag = 'smem constant byte address 0x4 - core index']
  #allocation1 [shape = 'u32[144,128]{1,0:T(1,128)}', space=vmem, size = 0x12000, scoped, tag = 'internal scratch']
  %s0 = inlined_call_operand.vmem [shape: s32[8,1], index: 0, kind: input, shape index: {}]
  %s1 = inlined_call_operand.vmem [shape: s32[1,8], index: 1, kind: input, shape index: {}]
  %s2 = inlined_call_operand.vmem [shape: f32[8,1], index: 2, kind: input, shape index: {}]
  %s3 = inlined_call_operand.hbm [shape: bf16[128,128], index: 3, kind: input, shape index: {}]
  %s4 = inlined_call_operand.vmem [shape: f32[1,128], index: 4, kind: input, shape index: {}]
  %s5 = inlined_call_operand.hbm [shape: bf16[128,128], index: 5, kind: input, shape index: {}]
  %s6 = inlined_call_operand.vmem [shape: f32[1,128], index: 6, kind: input, shape index: {}]
  %s7 = inlined_call_operand.hbm [shape: bf16[128,128], index: 7, kind: input, shape index: {}]
  %s8 = inlined_call_operand.vmem [shape: f32[1,128], index: 8, kind: input, shape index: {}]
  %s9 = inlined_call_operand.hbm [shape: bf16[8,128], index: 9, kind: output, shape index: {0}]
  %s10 = inlined_call_operand.hbm [shape: f32[8,128], index: 10, kind: output, shape index: {1}]
  %11 = xla_tuple %s9, %s10
  %s12 = sld [smem:[#allocation0]]
  $region74: #{tpu_custom_call.1} parent=0
    _
  %s14 = ssub.s32 1, %s12
  %s15 = scalar_select 0, %s14, %s12
  $region1: #{tpu_custom_call.1} parent=0
    #allocation2 [shape = 'u8[32768]{0}', space=vmem, size = 0x8000, scoped, tag = 'input window, operand 3, single buffered']
    #allocation3 [shape = 's32[1]{0}', space=sflag, size = 0x4, scoped, tag = 'scoped memory for tpu_custom_call.1']
    #allocation4 [shape = 's32[1]{0}', space=sflag, size = 0x4, scoped, tag = 'scoped memory for tpu_custom_call.1']
    #allocation5 [shape = 'u8[32768]{0}', space=vmem, size = 0x8000, scoped, tag = 'input window, operand 5, single buffered']
    #allocation6 [shape = 's32[1]{0}', space=sflag, size = 0x4, scoped, tag = 'scoped memory for tpu_custom_call.1']
    #allocation7 [shape = 'u8[32768]{0}', space=vmem, size = 0x8000, scoped, tag = 'input window, operand 7, single buffered']
    #allocation8 [shape = 'u8[2048]{0}', space=vmem, size = 0x800, scoped, tag = 'output window, operand 0, single buffered']
    #allocation9 [shape = 'u8[4096]{0}', space=vmem, size = 0x1000, scoped, tag = 'output window, operand 1, single buffered']
    #allocation10 [shape = 's32[1]{0}', space=sflag, size = 0x4, scoped, tag = 'scoped memory for tpu_custom_call.1']
    %16 = vsyncpa [#allocation3], 0
    %17 = vsyncpa [#allocation6], 0
    %18 = vsyncpa [#allocation4], 0
    %19 = vsyncpa [#allocation10], 0
    // Predicated region
    $region2: #{tpu_custom_call.1} parent=1 // pred_check
      _
    $region3: #{tpu_custom_call.1} parent=1 // pred_check_branch
      %21 = sbr.rel (0) target = $region5
    $region4: #{tpu_custom_call.1} parent=1 // pred_region
      _
    $region5: #{tpu_custom_call.1} parent=1 // pred_fallthru
      _
    // Predicated region
    $region6: #{tpu_custom_call.1} parent=1 // pred_check
      _
    $region7: #{tpu_custom_call.1} parent=1 // pred_check_branch
      %23 = sbr.rel (0) target = $region9
    $region8: #{tpu_custom_call.1} parent=1 // pred_region
      _
    $region9: #{tpu_custom_call.1} parent=1 // pred_fallthru
      _
    // Predicated region
    $region10: #{tpu_custom_call.1} parent=1 // pred_check
      _
    $region11: #{tpu_custom_call.1} parent=1 // pred_check_branch
      %25 = sbr.rel (0) target = $region13
    $region12: #{tpu_custom_call.1} parent=1 // pred_region
      _
    $region13: #{tpu_custom_call.1} parent=1 // pred_fallthru
      _
    // Predicated region
    $region14: #{tpu_custom_call.1} parent=1 // pred_check
      _
    $region15: #{tpu_custom_call.1} parent=1 // pred_check_branch
      %27 = sbr.rel (0) target = $region17
    $region16: #{tpu_custom_call.1} parent=1 // pred_region
      %s29 = ssub.s32 1024, 1024
      %30 = vsyncadd [#allocation3], %s29
      %s31 = sshll.u32 [#allocation2], 4
      %s32 = int_to_ptr.vmem [resolvable:$true] %s31
      %37 = dma.hbm_to_vmem [thread:$0]  %s3, 1024, %s32, [#allocation3], 64, 64, 4
    $region17: #{tpu_custom_call.1} parent=1 // pred_fallthru
      _
    // Predicated region
    $region18: #{tpu_custom_call.1} parent=1 // pred_check
      _
    $region19: #{tpu_custom_call.1} parent=1 // pred_check_branch
      %39 = sbr.rel (0) target = $region21
    $region20: #{tpu_custom_call.1} parent=1 // pred_region
      _
    $region21: #{tpu_custom_call.1} parent=1 // pred_fallthru
      _
    // Predicated region
    $region22: #{tpu_custom_call.1} parent=1 // pred_check
      _
    $region23: #{tpu_custom_call.1} parent=1 // pred_check_branch
      %41 = sbr.rel (0) target = $region25
    $region24: #{tpu_custom_call.1} parent=1 // pred_region
      %s43 = ssub.s32 1024, 1024
      %44 = vsyncadd [#allocation6], %s43
      %s45 = sshll.u32 [#allocation5], 4
      %s46 = int_to_ptr.vmem [resolvable:$true] %s45
      %51 = dma.hbm_to_vmem [thread:$0]  %s5, 1024, %s46, [#allocation6], 64, 64, 4
    $region25: #{tpu_custom_call.1} parent=1 // pred_fallthru
      _
    // Predicated region
    $region26: #{tpu_custom_call.1} parent=1 // pred_check
      _
    $region27: #{tpu_custom_call.1} parent=1 // pred_check_branch
      %53 = sbr.rel (0) target = $region29
    $region28: #{tpu_custom_call.1} parent=1 // pred_region
      _
    $region29: #{tpu_custom_call.1} parent=1 // pred_fallthru
      _
    // Predicated region
    $region30: #{tpu_custom_call.1} parent=1 // pred_check
      _
    $region31: #{tpu_custom_call.1} parent=1 // pred_check_branch
      %55 = sbr.rel (0) target = $region33
    $region32: #{tpu_custom_call.1} parent=1 // pred_region
      %s57 = ssub.s32 1024, 1024
      %58 = vsyncadd [#allocation6], %s57
      %s59 = sshll.u32 [#allocation7], 4
      %s60 = int_to_ptr.vmem [resolvable:$true] %s59
      %65 = dma.hbm_to_vmem [thread:$0]  %s7, 1024, %s60, [#allocation6], 64, 64, 4
    $region33: #{tpu_custom_call.1} parent=1 // pred_fallthru
      _
    // Predicated region
    $region34: #{tpu_custom_call.1} parent=1 // pred_check
      _
    $region35: #{tpu_custom_call.1} parent=1 // pred_check_branch
      %67 = sbr.rel (0) target = $region37
    $region36: #{tpu_custom_call.1} parent=1 // pred_region
      _
    $region37: #{tpu_custom_call.1} parent=1 // pred_fallthru
      _
    // Predicated region
    $region38: #{tpu_custom_call.1} parent=1 // pred_check
      _
    $region39: #{tpu_custom_call.1} parent=1 // pred_check_branch
      %69 = sbr.rel (0) target = $region41
    $region40: #{tpu_custom_call.1} parent=1 // pred_region
      %70 = dma.done [#allocation3], 1024
    $region41: #{tpu_custom_call.1} parent=1 // pred_fallthru
      _
    // Predicated region
    $region42: #{tpu_custom_call.1} parent=1 // pred_check
      _
    $region43: #{tpu_custom_call.1} parent=1 // pred_check_branch
      %72 = sbr.rel (0) target = $region45
    $region44: #{tpu_custom_call.1} parent=1 // pred_region
      %73 = dma.done [#allocation6], 1024
    $region45: #{tpu_custom_call.1} parent=1 // pred_fallthru
      _
    // Predicated region
    $region46: #{tpu_custom_call.1} parent=1 // pred_check
      _
    $region47: #{tpu_custom_call.1} parent=1 // pred_check_branch
      %75 = sbr.rel (0) target = $region49
    $region48: #{tpu_custom_call.1} parent=1 // pred_region
      %76 = dma.done [#allocation6], 1024
    $region49: #{tpu_custom_call.1} parent=1 // pred_fallthru
      _
    %v78 = vld [vmem:[%s0] sm:$0xff]
    %v79 = vlaneseq
    %v80 = vand.u32 %v79, 127
    %81 = vset.pattern.permute.xlu0 0
    %82 = vperm.xlu0 %81, %v78
    %v83 = vpop.permute.xlu0 %82
    %vm84 = vcmp.eq.s32.totalorder %v80, %v83
    %v85 = vsel %vm84, 1, 0
    %v86 = vcvt.s32.f32 %v85
    %v87 = vpack.c.bf16 %v86, %v86
    %v88 = vld [vmem:[#allocation2] sm:$0xf]
    %v89 = vld [vmem:[#allocation2 + $0x4] sm:$0xf]
    %v90 = vld [vmem:[#allocation2 + $0x8] sm:$0xf]
    %v91 = vld [vmem:[#allocation2 + $0xc] sm:$0xf]
    %v92 = vld [vmem:[#allocation2 + $0x10] sm:$0xf]
    %v93 = vld [vmem:[#allocation2 + $0x14] sm:$0xf]
    %v94 = vld [vmem:[#allocation2 + $0x18] sm:$0xf]
    %v95 = vld [vmem:[#allocation2 + $0x1c] sm:$0xf]
    %v96 = vld [vmem:[#allocation2 + $0x20] sm:$0xf]
    %v97 = vld [vmem:[#allocation2 + $0x24] sm:$0xf]
    %v98 = vld [vmem:[#allocation2 + $0x28] sm:$0xf]
    %v99 = vld [vmem:[#allocation2 + $0x2c] sm:$0xf]
    %v100 = vld [vmem:[#allocation2 + $0x30] sm:$0xf]
    %v101 = vld [vmem:[#allocation2 + $0x34] sm:$0xf]
    %v102 = vld [vmem:[#allocation2 + $0x38] sm:$0xf]
    %v103 = vld [vmem:[#allocation2 + $0x3c] sm:$0xf]
    %v104 = vld [vmem:[%s4] sm:$0x1]
    %v106 = vlaneseq
    %v107 = vshrl.u32 %v106, 7
    %v108 = vsub.s32 0, %v107
    %v109 = vrot.slane %v104, %v108
    %v127 = vunpack.c.l.b16 %v88
    %v128 = vunpack.c.l.b16 %v89
    %v129 = vunpack.c.l.b16 %v90
    %v130 = vunpack.c.l.b16 %v91
    %v131 = vunpack.c.l.b16 %v92
    %v132 = vunpack.c.l.b16 %v93
    %v133 = vunpack.c.l.b16 %v94
    %v134 = vunpack.c.l.b16 %v95
    %v135 = vunpack.c.l.b16 %v96
    %v136 = vunpack.c.l.b16 %v97
    %v137 = vunpack.c.l.b16 %v98
    %v138 = vunpack.c.l.b16 %v99
    %v139 = vunpack.c.l.b16 %v100
    %v140 = vunpack.c.l.b16 %v101
    %v141 = vunpack.c.l.b16 %v102
    %v142 = vunpack.c.l.b16 %v103
    %v143 = vpack.c.b16 %v128, %v127
    %v144 = vpack.c.b16 %v130, %v129
    %v145 = vpack.c.b16 %v132, %v131
    %v146 = vpack.c.b16 %v134, %v133
    %v147 = vpack.c.b16 %v136, %v135
    %v148 = vpack.c.b16 %v138, %v137
    %v149 = vpack.c.b16 %v140, %v139
    %v150 = vpack.c.b16 %v142, %v141
    %159 = vmatprep.subr.bf16.mxu0 0
    %160 = vmatpush1.bf16.msra.mxu0 %v143
    %161 = vmatprep.subr.bf16.mxu0 0
    %162 = vmatpush1.bf16.msra.mxu0 %v144
    %163 = vmatprep.subr.bf16.mxu0 0
    %164 = vmatpush1.bf16.msra.mxu0 %v145
    %165 = vmatprep.subr.bf16.mxu0 0
    %166 = vmatpush1.bf16.msra.mxu0 %v146
    %167 = vmatprep.subr.bf16.mxu0 0
    %168 = vmatpush1.bf16.msra.mxu0 %v147
    %169 = vmatprep.subr.bf16.mxu0 0
    %170 = vmatpush1.bf16.msra.mxu0 %v148
    %171 = vmatprep.subr.bf16.mxu0 0
    %172 = vmatpush1.bf16.msra.mxu0 %v149
    %173 = vmatprep.subr.bf16.mxu0 0
    %174 = vmatpush1.bf16.msra.mxu0 %v150
    %175 = vmatprep.subr.bf16.mxu0 0
    %176 = vmatpush1.bf16.msra.mxu0 0
    %177 = vmatprep.subr.bf16.mxu0 0
    %178 = vmatpush1.bf16.msra.mxu0 0
    %179 = vmatprep.subr.bf16.mxu0 0
    %180 = vmatpush1.bf16.msra.mxu0 0
    %181 = vmatprep.subr.bf16.mxu0 0
    %182 = vmatpush1.bf16.msra.mxu0 0
    %183 = vmatprep.subr.bf16.mxu0 0
    %184 = vmatpush1.bf16.msra.mxu0 0
    %185 = vmatprep.subr.bf16.mxu0 0
    %186 = vmatpush1.bf16.msra.mxu0 0
    %187 = vmatprep.subr.bf16.mxu0 0
    %188 = vmatpush1.bf16.msra.mxu0 0
    %189 = vmatprep.subr.bf16.mxu0 0
    %190 = vmatpush1.bf16.msra.mxu0 0
    %191 = vmatprep.mubr.bf16.mxu0 0
    %192 = vmatmul.mubr.bf16.gmra.mrb[0].mxu0 %v87
    %v193 = vpop.f32.mrb[0].mxu0
    %v194 = vadd.f32 %v109, %v193
    %v195 = vpop.f32.mrb[0].mxu0
    %v196 = vpop.f32.mrb[0].mxu0
    %v197 = vpop.f32.mrb[0].mxu0
    %198 = vdwg.mxu0
    %v199 = vmax.f32 %v194, 0.0
    %v200 = vpack.c.bf16 %v199, %v199
    %v201 = vld [vmem:[#allocation5] sm:$0xf]
    %v202 = vld [vmem:[#allocation5 + $0x4] sm:$0xf]
    %v203 = vld [vmem:[#allocation5 + $0x8] sm:$0xf]
    %v204 = vld [vmem:[#allocation5 + $0xc] sm:$0xf]
    %v205 = vld [vmem:[#allocation5 + $0x10] sm:$0xf]
    %v206 = vld [vmem:[#allocation5 + $0x14] sm:$0xf]
    %v207 = vld [vmem:[#allocation5 + $0x18] sm:$0xf]
    %v208 = vld [vmem:[#allocation5 + $0x1c] sm:$0xf]
    %v209 = vld [vmem:[#allocation5 + $0x20] sm:$0xf]
    %v210 = vld [vmem:[#allocation5 + $0x24] sm:$0xf]
    %v211 = vld [vmem:[#allocation5 + $0x28] sm:$0xf]
    %v212 = vld [vmem:[#allocation5 + $0x2c] sm:$0xf]
    %v213 = vld [vmem:[#allocation5 + $0x30] sm:$0xf]
    %v214 = vld [vmem:[#allocation5 + $0x34] sm:$0xf]
    %v215 = vld [vmem:[#allocation5 + $0x38] sm:$0xf]
    %v216 = vld [vmem:[#allocation5 + $0x3c] sm:$0xf]
    %v217 = vld [vmem:[%s6] sm:$0x1]
    %v219 = vlaneseq
    %v220 = vshrl.u32 %v219, 7
    %v221 = vsub.s32 0, %v220
    %v222 = vrot.slane %v217, %v221
    %v240 = vunpack.c.l.b16 %v201
    %v241 = vunpack.c.l.b16 %v202
    %v242 = vunpack.c.l.b16 %v203
    %v243 = vunpack.c.l.b16 %v204
    %v244 = vunpack.c.l.b16 %v205
    %v245 = vunpack.c.l.b16 %v206
    %v246 = vunpack.c.l.b16 %v207
    %v247 = vunpack.c.l.b16 %v208
    %v248 = vunpack.c.l.b16 %v209
    %v249 = vunpack.c.l.b16 %v210
    %v250 = vunpack.c.l.b16 %v211
    %v251 = vunpack.c.l.b16 %v212
    %v252 = vunpack.c.l.b16 %v213
    %v253 = vunpack.c.l.b16 %v214
    %v254 = vunpack.c.l.b16 %v215
    %v255 = vunpack.c.l.b16 %v216
    %v256 = vpack.c.b16 %v241, %v240
    %v257 = vpack.c.b16 %v243, %v242
    %v258 = vpack.c.b16 %v245, %v244
    %v259 = vpack.c.b16 %v247, %v246
    %v260 = vpack.c.b16 %v249, %v248
    %v261 = vpack.c.b16 %v251, %v250
    %v262 = vpack.c.b16 %v253, %v252
    %v263 = vpack.c.b16 %v255, %v254
    %272 = vmatprep.subr.bf16.mxu0 0
    %273 = vmatpush1.bf16.msra.mxu0 %v256
    %274 = vmatprep.subr.bf16.mxu0 0
    %275 = vmatpush1.bf16.msra.mxu0 %v257
    %276 = vmatprep.subr.bf16.mxu0 0
    %277 = vmatpush1.bf16.msra.mxu0 %v258
    %278 = vmatprep.subr.bf16.mxu0 0
    %279 = vmatpush1.bf16.msra.mxu0 %v259
    %280 = vmatprep.subr.bf16.mxu0 0
    %281 = vmatpush1.bf16.msra.mxu0 %v260
    %282 = vmatprep.subr.bf16.mxu0 0
    %283 = vmatpush1.bf16.msra.mxu0 %v261
    %284 = vmatprep.subr.bf16.mxu0 0
    %285 = vmatpush1.bf16.msra.mxu0 %v262
    %286 = vmatprep.subr.bf16.mxu0 0
    %287 = vmatpush1.bf16.msra.mxu0 %v263
    %288 = vmatprep.subr.bf16.mxu0 0
    %289 = vmatpush1.bf16.msra.mxu0 0
    %290 = vmatprep.subr.bf16.mxu0 0
    %291 = vmatpush1.bf16.msra.mxu0 0
    %292 = vmatprep.subr.bf16.mxu0 0
    %293 = vmatpush1.bf16.msra.mxu0 0
    %294 = vmatprep.subr.bf16.mxu0 0
    %295 = vmatpush1.bf16.msra.mxu0 0
    %296 = vmatprep.subr.bf16.mxu0 0
    %297 = vmatpush1.bf16.msra.mxu0 0
    %298 = vmatprep.subr.bf16.mxu0 0
    %299 = vmatpush1.bf16.msra.mxu0 0
    %300 = vmatprep.subr.bf16.mxu0 0
    %301 = vmatpush1.bf16.msra.mxu0 0
    %302 = vmatprep.subr.bf16.mxu0 0
    %303 = vmatpush1.bf16.msra.mxu0 0
    %304 = vmatprep.mubr.bf16.mxu0 0
    %305 = vmatmul.mubr.bf16.gmra.mrb[0].mxu0 %v200
    %v306 = vpop.f32.mrb[0].mxu0
    %v307 = vadd.f32 %v222, %v306
    %v308 = vpop.f32.mrb[0].mxu0
    %v309 = vpop.f32.mrb[0].mxu0
    %v310 = vpop.f32.mrb[0].mxu0
    %311 = vdwg.mxu0
    %v312 = vmax.f32 %v307, 0.0
    %v313 = vpack.c.bf16 %v312, %v312
    %v314 = vld [vmem:[#allocation7] sm:$0xf]
    %v315 = vld [vmem:[#allocation7 + $0x4] sm:$0xf]
    %v316 = vld [vmem:[#allocation7 + $0x8] sm:$0xf]
    %v317 = vld [vmem:[#allocation7 + $0xc] sm:$0xf]
    %v318 = vld [vmem:[#allocation7 + $0x10] sm:$0xf]
    %v319 = vld [vmem:[#allocation7 + $0x14] sm:$0xf]
    %v320 = vld [vmem:[#allocation7 + $0x18] sm:$0xf]
    %v321 = vld [vmem:[#allocation7 + $0x1c] sm:$0xf]
    %v322 = vld [vmem:[#allocation7 + $0x20] sm:$0xf]
    %v323 = vld [vmem:[#allocation7 + $0x24] sm:$0xf]
    %v324 = vld [vmem:[#allocation7 + $0x28] sm:$0xf]
    %v325 = vld [vmem:[#allocation7 + $0x2c] sm:$0xf]
    %v326 = vld [vmem:[#allocation7 + $0x30] sm:$0xf]
    %v327 = vld [vmem:[#allocation7 + $0x34] sm:$0xf]
    %v328 = vld [vmem:[#allocation7 + $0x38] sm:$0xf]
    %v329 = vld [vmem:[#allocation7 + $0x3c] sm:$0xf]
    %v330 = vld [vmem:[%s8] sm:$0x1]
    %v332 = vlaneseq
    %v333 = vshrl.u32 %v332, 7
    %v334 = vsub.s32 0, %v333
    %v335 = vrot.slane %v330, %v334
    %v353 = vunpack.c.l.b16 %v314
    %v354 = vunpack.c.l.b16 %v315
    %v355 = vunpack.c.l.b16 %v316
    %v356 = vunpack.c.l.b16 %v317
    %v357 = vunpack.c.l.b16 %v318
    %v358 = vunpack.c.l.b16 %v319
    %v359 = vunpack.c.l.b16 %v320
    %v360 = vunpack.c.l.b16 %v321
    %v361 = vunpack.c.l.b16 %v322
    %v362 = vunpack.c.l.b16 %v323
    %v363 = vunpack.c.l.b16 %v324
    %v364 = vunpack.c.l.b16 %v325
    %v365 = vunpack.c.l.b16 %v326
    %v366 = vunpack.c.l.b16 %v327
    %v367 = vunpack.c.l.b16 %v328
    %v368 = vunpack.c.l.b16 %v329
    %v369 = vpack.c.b16 %v354, %v353
    %v370 = vpack.c.b16 %v356, %v355
    %v371 = vpack.c.b16 %v358, %v357
    %v372 = vpack.c.b16 %v360, %v359
    %v373 = vpack.c.b16 %v362, %v361
    %v374 = vpack.c.b16 %v364, %v363
    %v375 = vpack.c.b16 %v366, %v365
    %v376 = vpack.c.b16 %v368, %v367
    %385 = vmatprep.subr.bf16.mxu0 0
    %386 = vmatpush1.bf16.msra.mxu0 %v369
    %387 = vmatprep.subr.bf16.mxu0 0
    %388 = vmatpush1.bf16.msra.mxu0 %v370
    %389 = vmatprep.subr.bf16.mxu0 0
    %390 = vmatpush1.bf16.msra.mxu0 %v371
    %391 = vmatprep.subr.bf16.mxu0 0
    %392 = vmatpush1.bf16.msra.mxu0 %v372
    %393 = vmatprep.subr.bf16.mxu0 0
    %394 = vmatpush1.bf16.msra.mxu0 %v373
    %395 = vmatprep.subr.bf16.mxu0 0
    %396 = vmatpush1.bf16.msra.mxu0 %v374
    %397 = vmatprep.subr.bf16.mxu0 0
    %398 = vmatpush1.bf16.msra.mxu0 %v375
    %399 = vmatprep.subr.bf16.mxu0 0
    %400 = vmatpush1.bf16.msra.mxu0 %v376
    %401 = vmatprep.subr.bf16.mxu0 0
    %402 = vmatpush1.bf16.msra.mxu0 0
    %403 = vmatprep.subr.bf16.mxu0 0
    %404 = vmatpush1.bf16.msra.mxu0 0
    %405 = vmatprep.subr.bf16.mxu0 0
    %406 = vmatpush1.bf16.msra.mxu0 0
    %407 = vmatprep.subr.bf16.mxu0 0
    %408 = vmatpush1.bf16.msra.mxu0 0
    %409 = vmatprep.subr.bf16.mxu0 0
    %410 = vmatpush1.bf16.msra.mxu0 0
    %411 = vmatprep.subr.bf16.mxu0 0
    %412 = vmatpush1.bf16.msra.mxu0 0
    %413 = vmatprep.subr.bf16.mxu0 0
    %414 = vmatpush1.bf16.msra.mxu0 0
    %415 = vmatprep.subr.bf16.mxu0 0
    %416 = vmatpush1.bf16.msra.mxu0 0
    %417 = vmatprep.mubr.bf16.mxu0 0
    %418 = vmatmul.mubr.bf16.gmra.mrb[0].mxu0 %v313
    %v419 = vpop.f32.mrb[0].mxu0
    %v420 = vadd.f32 %v335, %v419
    %v421 = vpop.f32.mrb[0].mxu0
    %v422 = vpop.f32.mrb[0].mxu0
    %v423 = vpop.f32.mrb[0].mxu0
    %424 = vdwg.mxu0
    %v425 = vpack.c.bf16 %v420, %v420
    %426 = vst [vmem:[#allocation8] sm:$0xf] %v425
    %v427 = vld [vmem:[%s1] sm:$0x1]
    %v428 = vlaneseq
    %v429 = vshrl.u32 %v428, 7
    %v430 = vlaneseq
    %v431 = vshrl.u32 %v430, 7
    %v432 = vsub.s32 0, %v431
    %v433 = vrot.slane %v427, %v432
    %vm434 = vcmp.eq.s32.totalorder %v429, %v433
    %v435 = vsel %vm434, 1, 0
    %v436 = vcvt.s32.f32 %v435
    %p437 = scmp.eq.s32.totalorder 0, 0
    // Predicated region
    $region50: #{tpu_custom_call.1} parent=1 // pred_check
      %p438 = pneg %p437
    $region51: #{tpu_custom_call.1} parent=1 // pred_check_branch
      %440 = sbr.rel (%p438) target = $region53
    $region52: #{tpu_custom_call.1} parent=1 // pred_region
      %441 = vst [vmem:[#allocation9] sm:$0xff] 0.0
    $region53: #{tpu_custom_call.1} parent=1 // pred_fallthru
      _
    %v442 = vld [vmem:[#allocation9] sm:$0xff]
    %vm443 = vcmask 64512
    %v445 = vsel %vm443, %v436, 0
    %447 = vmatprep.subr.mxu0 0.0
    %448 = vmatpush1.msra.mxu0 %v420
    %449 = vmatprep.subr.mxu0 0.0
    %450 = vmatpush1.msra.mxu0 0.0
    %451 = vmatprep.subr.mxu0 0.0
    %452 = vmatpush1.msra.mxu0 0.0
    %453 = vmatprep.subr.mxu0 0.0
    %454 = vmatpush1.msra.mxu0 0.0
    %455 = vmatprep.subr.mxu0 0.0
    %456 = vmatpush1.msra.mxu0 0.0
    %457 = vmatprep.subr.mxu0 0.0
    %458 = vmatpush1.msra.mxu0 0.0
    %459 = vmatprep.subr.mxu0 0.0
    %460 = vmatpush1.msra.mxu0 0.0
    %461 = vmatprep.subr.mxu0 0.0
    %462 = vmatpush1.msra.mxu0 0.0
    %463 = vmatprep.subr.mxu0 0.0
    %464 = vmatpush1.msra.mxu0 0.0
    %465 = vmatprep.subr.mxu0 0.0
    %466 = vmatpush1.msra.mxu0 0.0
    %467 = vmatprep.subr.mxu0 0.0
    %468 = vmatpush1.msra.mxu0 0.0
    %469 = vmatprep.subr.mxu0 0.0
    %470 = vmatpush1.msra.mxu0 0.0
    %471 = vmatprep.subr.mxu0 0.0
    %472 = vmatpush1.msra.mxu0 0.0
    %473 = vmatprep.subr.mxu0 0.0
    %474 = vmatpush1.msra.mxu0 0.0
    %475 = vmatprep.subr.mxu0 0.0
    %476 = vmatpush1.msra.mxu0 0.0
    %477 = vmatprep.subr.mxu0 0.0
    %478 = vmatpush1.msra.mxu0 0.0
    %479 = vmatprep.subr.mxu0 0.0
    %480 = vmatpush1.msra.mxu0 0.0
    %481 = vmatprep.subr.mxu0 0.0
    %482 = vmatpush1.msra.mxu0 0.0
    %483 = vmatprep.subr.mxu0 0.0
    %484 = vmatpush1.msra.mxu0 0.0
    %485 = vmatprep.subr.mxu0 0.0
    %486 = vmatpush1.msra.mxu0 0.0
    %487 = vmatprep.subr.mxu0 0.0
    %488 = vmatpush1.msra.mxu0 0.0
    %489 = vmatprep.subr.mxu0 0.0
    %490 = vmatpush1.msra.mxu0 0.0
    %491 = vmatprep.subr.mxu0 0.0
    %492 = vmatpush1.msra.mxu0 0.0
    %493 = vmatprep.subr.mxu0 0.0
    %494 = vmatpush1.msra.mxu0 0.0
    %495 = vmatprep.subr.mxu0 0.0
    %496 = vmatpush1.msra.mxu0 0.0
    %497 = vmatprep.subr.mxu0 0.0
    %498 = vmatpush1.msra.mxu0 0.0
    %499 = vmatprep.subr.mxu0 0.0
    %500 = vmatpush1.msra.mxu0 0.0
    %501 = vmatprep.subr.mxu0 0.0
    %502 = vmatpush1.msra.mxu0 0.0
    %503 = vmatprep.subr.mxu0 0.0
    %504 = vmatpush1.msra.mxu0 0.0
    %505 = vmatprep.subr.mxu0 0.0
    %506 = vmatpush1.msra.mxu0 0.0
    %507 = vmatprep.subr.mxu0 0.0
    %508 = vmatpush1.msra.mxu0 0.0
    %509 = vmatprep.subr.mxu0 0.0
    %510 = vmatpush1.msra.mxu0 0.0
    %511 = vmatprep.mubr.f32.mxu0 0.0
    %512 = vmatmul.mubr.f32.gmra.mrb[0].mxu0 %v445
    %v513 = vpop.f32.mrb[0].mxu0
    %v514 = vadd.f32 0.0, %v513
    %v515 = vpop.f32.mrb[0].mxu0
    %516 = vdwg.mxu0
    %v517 = vadd.f32 %v442, %v514
    %518 = vst [vmem:[#allocation9] sm:$0xff] %v517
    // Predicated region
    $region54: #{tpu_custom_call.1} parent=1 // pred_check
      %p519 = pneg %p437
    $region55: #{tpu_custom_call.1} parent=1 // pred_check_branch
      %521 = sbr.rel (%p519) target = $region57
    $region56: #{tpu_custom_call.1} parent=1 // pred_region
      %v522 = vld [vmem:[#allocation9] sm:$0xff]
      %v523 = vld [vmem:[%s2] sm:$0xff]
      %525 = vset.pattern.permute.xlu0 0
      %526 = vperm.xlu0 %525, %v523
      %v527 = vpop.permute.xlu0 %526
      %v529 = vmul.f32 %v522, %v527
      %530 = vst [vmem:[#allocation9] sm:$0xff] %v529
    $region57: #{tpu_custom_call.1} parent=1 // pred_fallthru
      _
    // Predicated region
    $region58: #{tpu_custom_call.1} parent=1 // pred_check
      _
    $region59: #{tpu_custom_call.1} parent=1 // pred_check_branch
      %532 = sbr.rel (0) target = $region61
    $region60: #{tpu_custom_call.1} parent=1 // pred_region
      %s534 = ssub.s32 64, 64
      %535 = vsyncadd [#allocation4], %s534
      %s537 = sshll.u32 [#allocation8], 4
      %s538 = int_to_ptr.vmem [resolvable:$true] %s537
      %540 = dma.vmem_to_hbm [thread:$0]  %s538, 64, %s9, [#allocation4]
    $region61: #{tpu_custom_call.1} parent=1 // pred_fallthru
      _
    // Predicated region
    $region62: #{tpu_custom_call.1} parent=1 // pred_check
      _
    $region63: #{tpu_custom_call.1} parent=1 // pred_check_branch
      %542 = sbr.rel (0) target = $region65
    $region64: #{tpu_custom_call.1} parent=1 // pred_region
      %s544 = ssub.s32 128, 128
      %545 = vsyncadd [#allocation10], %s544
      %s547 = sshll.u32 [#allocation9], 4
      %s548 = int_to_ptr.vmem [resolvable:$true] %s547
      %550 = dma.vmem_to_hbm [thread:$0]  %s548, 128, %s10, [#allocation10]
    $region65: #{tpu_custom_call.1} parent=1 // pred_fallthru
      _
    // Predicated region
    $region66: #{tpu_custom_call.1} parent=1 // pred_check
      _
    $region67: #{tpu_custom_call.1} parent=1 // pred_check_branch
      %552 = sbr.rel (0) target = $region69
    $region68: #{tpu_custom_call.1} parent=1 // pred_region
      %553 = dma.done [#allocation4], 64
    $region69: #{tpu_custom_call.1} parent=1 // pred_fallthru
      _
    // Predicated region
    $region70: #{tpu_custom_call.1} parent=1 // pred_check
      _
    $region71: #{tpu_custom_call.1} parent=1 // pred_check_branch
      %555 = sbr.rel (0) target = $region73
    $region72: #{tpu_custom_call.1} parent=1 // pred_region
      %556 = dma.done [#allocation10], 128
    $region73: #{tpu_custom_call.1} parent=1 // pred_fallthru
      _
    %557 = vsyncpa [#allocation3], 1
    %558 = vsyncpa [#allocation6], 1
    %559 = vsyncpa [#allocation4], 1
    %560 = vsyncpa [#allocation10], 1

// kernel: tpu_custom_call.1
$region0: #{tpu_custom_call.1}
  #allocation0 [shape = 'u32[]', space=smem, size = 0x4, offset = 0x4, fixed_abs, tag = 'smem constant byte address 0x4 - core index']
  #allocation1 [shape = 'u32[144,128]{1,0:T(1,128)}', space=vmem, size = 0x12000, scoped, tag = 'internal scratch']
  %s0 = inlined_call_operand.vmem [shape: s32[8,1], index: 0, kind: input, shape index: {}]
  %s1 = inlined_call_operand.vmem [shape: s32[1,8], index: 1, kind: input, shape index: {}]
  %s2 = inlined_call_operand.vmem [shape: f32[8,1], index: 2, kind: input, shape index: {}]
  %s3 = inlined_call_operand.hbm [shape: bf16[128,128], index: 3, kind: input, shape index: {}]
  %s4 = inlined_call_operand.vmem [shape: f32[1,128], index: 4, kind: input, shape index: {}]
  %s5 = inlined_call_operand.hbm [shape: bf16[128,128], index: 5, kind: input, shape index: {}]
  %s6 = inlined_call_operand.vmem [shape: f32[1,128], index: 6, kind: input, shape index: {}]
  %s7 = inlined_call_operand.hbm [shape: bf16[128,128], index: 7, kind: input, shape index: {}]
  %s8 = inlined_call_operand.vmem [shape: f32[1,128], index: 8, kind: input, shape index: {}]
  %s9 = inlined_call_operand.hbm [shape: bf16[8,128], index: 9, kind: output, shape index: {0}]
  %s10 = inlined_call_operand.hbm [shape: f32[8,128], index: 10, kind: output, shape index: {1}]
  %11 = xla_tuple %s9, %s10
  %s12 = sld [smem:[#allocation0]]
  $region74: #{tpu_custom_call.1} parent=0
    _
  %s14 = ssub.s32 1, %s12
  %s15 = scalar_select 0, %s14, %s12
  $region1: #{tpu_custom_call.1} parent=0
    #allocation2 [shape = 'u8[32768]{0}', space=vmem, size = 0x8000, scoped, tag = 'input window, operand 3, single buffered']
    #allocation3 [shape = 's32[1]{0}', space=sflag, size = 0x4, scoped, tag = 'scoped memory for tpu_custom_call.1']
    #allocation4 [shape = 's32[1]{0}', space=sflag, size = 0x4, scoped, tag = 'scoped memory for tpu_custom_call.1']
    #allocation5 [shape = 'u8[32768]{0}', space=vmem, size = 0x8000, scoped, tag = 'input window, operand 5, single buffered']
    #allocation6 [shape = 's32[1]{0}', space=sflag, size = 0x4, scoped, tag = 'scoped memory for tpu_custom_call.1']
    #allocation7 [shape = 'u8[32768]{0}', space=vmem, size = 0x8000, scoped, tag = 'input window, operand 7, single buffered']
    #allocation8 [shape = 'u8[2048]{0}', space=vmem, size = 0x800, scoped, tag = 'output window, operand 0, single buffered']
    #allocation9 [shape = 'u8[4096]{0}', space=vmem, size = 0x1000, scoped, tag = 'output window, operand 1, single buffered']
    #allocation10 [shape = 's32[1]{0}', space=sflag, size = 0x4, scoped, tag = 'scoped memory for tpu_custom_call.1']
    %16 = vsyncpa [#allocation3], 0
    %17 = vsyncpa [#allocation6], 0
    %18 = vsyncpa [#allocation4], 0
    %19 = vsyncpa [#allocation10], 0
    // Predicated region
    $region2: #{tpu_custom_call.1} parent=1 // pred_check
      _
    $region3: #{tpu_custom_call.1} parent=1 // pred_check_branch
      %21 = sbr.rel (0) target = $region5
    $region4: #{tpu_custom_call.1} parent=1 // pred_region
      _
    $region5: #{tpu_custom_call.1} parent=1 // pred_fallthru
      _
    // Predicated region
    $region6: #{tpu_custom_call.1} parent=1 // pred_check
      _
    $region7: #{tpu_custom_call.1} parent=1 // pred_check_branch
      %23 = sbr.rel (0) target = $region9
    $region8: #{tpu_custom_call.1} parent=1 // pred_region
      _
    $region9: #{tpu_custom_call.1} parent=1 // pred_fallthru
      _
    // Predicated region
    $region10: #{tpu_custom_call.1} parent=1 // pred_check
      _
    $region11: #{tpu_custom_call.1} parent=1 // pred_check_branch
      %25 = sbr.rel (0) target = $region13
    $region12: #{tpu_custom_call.1} parent=1 // pred_region
      _
    $region13: #{tpu_custom_call.1} parent=1 // pred_fallthru
      _
    // Predicated region
    $region14: #{tpu_custom_call.1} parent=1 // pred_check
      _
    $region15: #{tpu_custom_call.1} parent=1 // pred_check_branch
      %27 = sbr.rel (0) target = $region17
    $region16: #{tpu_custom_call.1} parent=1 // pred_region
      %s29 = ssub.s32 1024, 1024
      %30 = vsyncadd [#allocation3], %s29
      %s31 = sshll.u32 [#allocation2], 4
      %s32 = int_to_ptr.vmem [resolvable:$true] %s31
      %37 = dma.hbm_to_vmem [thread:$0]  %s3, 1024, %s32, [#allocation3], 64, 64, 4
    $region17: #{tpu_custom_call.1} parent=1 // pred_fallthru
      _
    // Predicated region
    $region18: #{tpu_custom_call.1} parent=1 // pred_check
      _
    $region19: #{tpu_custom_call.1} parent=1 // pred_check_branch
      %39 = sbr.rel (0) target = $region21
    $region20: #{tpu_custom_call.1} parent=1 // pred_region
      _
    $region21: #{tpu_custom_call.1} parent=1 // pred_fallthru
      _
    // Predicated region
    $region22: #{tpu_custom_call.1} parent=1 // pred_check
      _
    $region23: #{tpu_custom_call.1} parent=1 // pred_check_branch
      %41 = sbr.rel (0) target = $region25
    $region24: #{tpu_custom_call.1} parent=1 // pred_region
      %s43 = ssub.s32 1024, 1024
      %44 = vsyncadd [#allocation6], %s43
      %s45 = sshll.u32 [#allocation5], 4
      %s46 = int_to_ptr.vmem [resolvable:$true] %s45
      %51 = dma.hbm_to_vmem [thread:$0]  %s5, 1024, %s46, [#allocation6], 64, 64, 4
    $region25: #{tpu_custom_call.1} parent=1 // pred_fallthru
      _
    // Predicated region
    $region26: #{tpu_custom_call.1} parent=1 // pred_check
      _
    $region27: #{tpu_custom_call.1} parent=1 // pred_check_branch
      %53 = sbr.rel (0) target = $region29
    $region28: #{tpu_custom_call.1} parent=1 // pred_region
      _
    $region29: #{tpu_custom_call.1} parent=1 // pred_fallthru
      _
    // Predicated region
    $region30: #{tpu_custom_call.1} parent=1 // pred_check
      _
    $region31: #{tpu_custom_call.1} parent=1 // pred_check_branch
      %55 = sbr.rel (0) target = $region33
    $region32: #{tpu_custom_call.1} parent=1 // pred_region
      %s57 = ssub.s32 1024, 1024
      %58 = vsyncadd [#allocation6], %s57
      %s59 = sshll.u32 [#allocation7], 4
      %s60 = int_to_ptr.vmem [resolvable:$true] %s59
      %65 = dma.hbm_to_vmem [thread:$0]  %s7, 1024, %s60, [#allocation6], 64, 64, 4
    $region33: #{tpu_custom_call.1} parent=1 // pred_fallthru
      _
    // Predicated region
    $region34: #{tpu_custom_call.1} parent=1 // pred_check
      _
    $region35: #{tpu_custom_call.1} parent=1 // pred_check_branch
      %67 = sbr.rel (0) target = $region37
    $region36: #{tpu_custom_call.1} parent=1 // pred_region
      _
    $region37: #{tpu_custom_call.1} parent=1 // pred_fallthru
      _
    // Predicated region
    $region38: #{tpu_custom_call.1} parent=1 // pred_check
      _
    $region39: #{tpu_custom_call.1} parent=1 // pred_check_branch
      %69 = sbr.rel (0) target = $region41
    $region40: #{tpu_custom_call.1} parent=1 // pred_region
      %70 = dma.done [#allocation3], 1024
    $region41: #{tpu_custom_call.1} parent=1 // pred_fallthru
      _
    // Predicated region
    $region42: #{tpu_custom_call.1} parent=1 // pred_check
      _
    $region43: #{tpu_custom_call.1} parent=1 // pred_check_branch
      %72 = sbr.rel (0) target = $region45
    $region44: #{tpu_custom_call.1} parent=1 // pred_region
      %73 = dma.done [#allocation6], 1024
    $region45: #{tpu_custom_call.1} parent=1 // pred_fallthru
      _
    // Predicated region
    $region46: #{tpu_custom_call.1} parent=1 // pred_check
      _
    $region47: #{tpu_custom_call.1} parent=1 // pred_check_branch
      %75 = sbr.rel (0) target = $region49
    $region48: #{tpu_custom_call.1} parent=1 // pred_region
      %76 = dma.done [#allocation6], 1024
    $region49: #{tpu_custom_call.1} parent=1 // pred_fallthru
      _
    %v78 = vld [vmem:[%s0] sm:$0xff]
    %v79 = vlaneseq
    %v80 = vand.u32 %v79, 127
    %81 = vset.pattern.permute.xlu0 0
    %82 = vperm.xlu0 %81, %v78
    %v83 = vpop.permute.xlu0 %82
    %vm84 = vcmp.eq.s32.totalorder %v80, %v83
    %v85 = vsel %vm84, 1, 0
    %v86 = vcvt.s32.f32 %v85
    %v87 = vpack.c.bf16 %v86, %v86
    %v88 = vld [vmem:[#allocation2] sm:$0xf]
    %v89 = vld [vmem:[#allocation2 + $0x4] sm:$0xf]
    %v90 = vld [vmem:[#allocation2 + $0x8] sm:$0xf]
    %v91 = vld [vmem:[#allocation2 + $0xc] sm:$0xf]
    %v92 = vld [vmem:[#allocation2 + $0x10] sm:$0xf]
    %v93 = vld [vmem:[#allocation2 + $0x14] sm:$0xf]
    %v94 = vld [vmem:[#allocation2 + $0x18] sm:$0xf]
    %v95 = vld [vmem:[#allocation2 + $0x1c] sm:$0xf]
    %v96 = vld [vmem:[#allocation2 + $0x20] sm:$0xf]
    %v97 = vld [vmem:[#allocation2 + $0x24] sm:$0xf]
    %v98 = vld [vmem:[#allocation2 + $0x28] sm:$0xf]
    %v99 = vld [vmem:[#allocation2 + $0x2c] sm:$0xf]
    %v100 = vld [vmem:[#allocation2 + $0x30] sm:$0xf]
    %v101 = vld [vmem:[#allocation2 + $0x34] sm:$0xf]
    %v102 = vld [vmem:[#allocation2 + $0x38] sm:$0xf]
    %v103 = vld [vmem:[#allocation2 + $0x3c] sm:$0xf]
    %v104 = vld [vmem:[%s4] sm:$0x1]
    %v106 = vlaneseq
    %v107 = vshrl.u32 %v106, 7
    %v108 = vsub.s32 0, %v107
    %v109 = vrot.slane %v104, %v108
    %v127 = vunpack.c.l.b16 %v88
    %v128 = vunpack.c.l.b16 %v89
    %v129 = vunpack.c.l.b16 %v90
    %v130 = vunpack.c.l.b16 %v91
    %v131 = vunpack.c.l.b16 %v92
    %v132 = vunpack.c.l.b16 %v93
    %v133 = vunpack.c.l.b16 %v94
    %v134 = vunpack.c.l.b16 %v95
    %v135 = vunpack.c.l.b16 %v96
    %v136 = vunpack.c.l.b16 %v97
    %v137 = vunpack.c.l.b16 %v98
    %v138 = vunpack.c.l.b16 %v99
    %v139 = vunpack.c.l.b16 %v100
    %v140 = vunpack.c.l.b16 %v101
    %v141 = vunpack.c.l.b16 %v102
    %v142 = vunpack.c.l.b16 %v103
    %v143 = vpack.c.b16 %v128, %v127
    %v144 = vpack.c.b16 %v130, %v129
    %v145 = vpack.c.b16 %v132, %v131
    %v146 = vpack.c.b16 %v134, %v133
    %v147 = vpack.c.b16 %v136, %v135
    %v148 = vpack.c.b16 %v138, %v137
    %v149 = vpack.c.b16 %v140, %v139
    %v150 = vpack.c.b16 %v142, %v141
    %159 = vmatprep.subr.bf16.mxu0 0
    %160 = vmatpush1.bf16.msra.mxu0 %v143
    %161 = vmatprep.subr.bf16.mxu0 0
    %162 = vmatpush1.bf16.msra.mxu0 %v144
    %163 = vmatprep.subr.bf16.mxu0 0
    %164 = vmatpush1.bf16.msra.mxu0 %v145
    %165 = vmatprep.subr.bf16.mxu0 0
    %166 = vmatpush1.bf16.msra.mxu0 %v146
    %167 = vmatprep.subr.bf16.mxu0 0
    %168 = vmatpush1.bf16.msra.mxu0 %v147
    %169 = vmatprep.subr.bf16.mxu0 0
    %170 = vmatpush1.bf16.msra.mxu0 %v148
    %171 = vmatprep.subr.bf16.mxu0 0
    %172 = vmatpush1.bf16.msra.mxu0 %v149
    %173 = vmatprep.subr.bf16.mxu0 0
    %174 = vmatpush1.bf16.msra.mxu0 %v150
    %175 = vmatprep.subr.bf16.mxu0 0
    %176 = vmatpush1.bf16.msra.mxu0 0
    %177 = vmatprep.subr.bf16.mxu0 0
    %178 = vmatpush1.bf16.msra.mxu0 0
    %179 = vmatprep.subr.bf16.mxu0 0
    %180 = vmatpush1.bf16.msra.mxu0 0
    %181 = vmatprep.subr.bf16.mxu0 0
    %182 = vmatpush1.bf16.msra.mxu0 0
    %183 = vmatprep.subr.bf16.mxu0 0
    %184 = vmatpush1.bf16.msra.mxu0 0
    %185 = vmatprep.subr.bf16.mxu0 0
    %186 = vmatpush1.bf16.msra.mxu0 0
    %187 = vmatprep.subr.bf16.mxu0 0
    %188 = vmatpush1.bf16.msra.mxu0 0
    %189 = vmatprep.subr.bf16.mxu0 0
    %190 = vmatpush1.bf16.msra.mxu0 0
    %191 = vmatprep.mubr.bf16.mxu0 0
    %192 = vmatmul.mubr.bf16.gmra.mrb[0].mxu0 %v87
    %v193 = vpop.f32.mrb[0].mxu0
    %v194 = vadd.f32 %v109, %v193
    %v195 = vpop.f32.mrb[0].mxu0
    %v196 = vpop.f32.mrb[0].mxu0
    %v197 = vpop.f32.mrb[0].mxu0
    %198 = vdwg.mxu0
    %v199 = vmax.f32 %v194, 0.0
    %v200 = vpack.c.bf16 %v199, %v199
    %v201 = vld [vmem:[#allocation5] sm:$0xf]
    %v202 = vld [vmem:[#allocation5 + $0x4] sm:$0xf]
    %v203 = vld [vmem:[#allocation5 + $0x8] sm:$0xf]
    %v204 = vld [vmem:[#allocation5 + $0xc] sm:$0xf]
    %v205 = vld [vmem:[#allocation5 + $0x10] sm:$0xf]
    %v206 = vld [vmem:[#allocation5 + $0x14] sm:$0xf]
    %v207 = vld [vmem:[#allocation5 + $0x18] sm:$0xf]
    %v208 = vld [vmem:[#allocation5 + $0x1c] sm:$0xf]
    %v209 = vld [vmem:[#allocation5 + $0x20] sm:$0xf]
    %v210 = vld [vmem:[#allocation5 + $0x24] sm:$0xf]
    %v211 = vld [vmem:[#allocation5 + $0x28] sm:$0xf]
    %v212 = vld [vmem:[#allocation5 + $0x2c] sm:$0xf]
    %v213 = vld [vmem:[#allocation5 + $0x30] sm:$0xf]
    %v214 = vld [vmem:[#allocation5 + $0x34] sm:$0xf]
    %v215 = vld [vmem:[#allocation5 + $0x38] sm:$0xf]
    %v216 = vld [vmem:[#allocation5 + $0x3c] sm:$0xf]
    %v217 = vld [vmem:[%s6] sm:$0x1]
    %v219 = vlaneseq
    %v220 = vshrl.u32 %v219, 7
    %v221 = vsub.s32 0, %v220
    %v222 = vrot.slane %v217, %v221
    %v240 = vunpack.c.l.b16 %v201
    %v241 = vunpack.c.l.b16 %v202
    %v242 = vunpack.c.l.b16 %v203
    %v243 = vunpack.c.l.b16 %v204
    %v244 = vunpack.c.l.b16 %v205
    %v245 = vunpack.c.l.b16 %v206
    %v246 = vunpack.c.l.b16 %v207
    %v247 = vunpack.c.l.b16 %v208
    %v248 = vunpack.c.l.b16 %v209
    %v249 = vunpack.c.l.b16 %v210
    %v250 = vunpack.c.l.b16 %v211
    %v251 = vunpack.c.l.b16 %v212
    %v252 = vunpack.c.l.b16 %v213
    %v253 = vunpack.c.l.b16 %v214
    %v254 = vunpack.c.l.b16 %v215
    %v255 = vunpack.c.l.b16 %v216
    %v256 = vpack.c.b16 %v241, %v240
    %v257 = vpack.c.b16 %v243, %v242
    %v258 = vpack.c.b16 %v245, %v244
    %v259 = vpack.c.b16 %v247, %v246
    %v260 = vpack.c.b16 %v249, %v248
    %v261 = vpack.c.b16 %v251, %v250
    %v262 = vpack.c.b16 %v253, %v252
    %v263 = vpack.c.b16 %v255, %v254
    %272 = vmatprep.subr.bf16.mxu0 0
    %273 = vmatpush1.bf16.msra.mxu0 %v256
    %274 = vmatprep.subr.bf16.mxu0 0
    %275 = vmatpush1.bf16.msra.mxu0 %v257
    %276 = vmatprep.subr.bf16.mxu0 0
    %277 = vmatpush1.bf16.msra.mxu0 %v258
    %278 = vmatprep.subr.bf16.mxu0 0
    %279 = vmatpush1.bf16.msra.mxu0 %v259
    %280 = vmatprep.subr.bf16.mxu0 0
    %281 = vmatpush1.bf16.msra.mxu0 %v260
    %282 = vmatprep.subr.bf16.mxu0 0
    %283 = vmatpush1.bf16.msra.mxu0 %v261
    %284 = vmatprep.subr.bf16.mxu0 0
    %285 = vmatpush1.bf16.msra.mxu0 %v262
    %286 = vmatprep.subr.bf16.mxu0 0
    %287 = vmatpush1.bf16.msra.mxu0 %v263
    %288 = vmatprep.subr.bf16.mxu0 0
    %289 = vmatpush1.bf16.msra.mxu0 0
    %290 = vmatprep.subr.bf16.mxu0 0
    %291 = vmatpush1.bf16.msra.mxu0 0
    %292 = vmatprep.subr.bf16.mxu0 0
    %293 = vmatpush1.bf16.msra.mxu0 0
    %294 = vmatprep.subr.bf16.mxu0 0
    %295 = vmatpush1.bf16.msra.mxu0 0
    %296 = vmatprep.subr.bf16.mxu0 0
    %297 = vmatpush1.bf16.msra.mxu0 0
    %298 = vmatprep.subr.bf16.mxu0 0
    %299 = vmatpush1.bf16.msra.mxu0 0
    %300 = vmatprep.subr.bf16.mxu0 0
    %301 = vmatpush1.bf16.msra.mxu0 0
    %302 = vmatprep.subr.bf16.mxu0 0
    %303 = vmatpush1.bf16.msra.mxu0 0
    %304 = vmatprep.mubr.bf16.mxu0 0
    %305 = vmatmul.mubr.bf16.gmra.mrb[0].mxu0 %v200
    %v306 = vpop.f32.mrb[0].mxu0
    %v307 = vadd.f32 %v222, %v306
    %v308 = vpop.f32.mrb[0].mxu0
    %v309 = vpop.f32.mrb[0].mxu0
    %v310 = vpop.f32.mrb[0].mxu0
    %311 = vdwg.mxu0
    %v312 = vmax.f32 %v307, 0.0
    %v313 = vpack.c.bf16 %v312, %v312
    %v314 = vld [vmem:[#allocation7] sm:$0xf]
    %v315 = vld [vmem:[#allocation7 + $0x4] sm:$0xf]
    %v316 = vld [vmem:[#allocation7 + $0x8] sm:$0xf]
    %v317 = vld [vmem:[#allocation7 + $0xc] sm:$0xf]
    %v318 = vld [vmem:[#allocation7 + $0x10] sm:$0xf]
    %v319 = vld [vmem:[#allocation7 + $0x14] sm:$0xf]
    %v320 = vld [vmem:[#allocation7 + $0x18] sm:$0xf]
    %v321 = vld [vmem:[#allocation7 + $0x1c] sm:$0xf]
    %v322 = vld [vmem:[#allocation7 + $0x20] sm:$0xf]
    %v323 = vld [vmem:[#allocation7 + $0x24] sm:$0xf]
    %v324 = vld [vmem:[#allocation7 + $0x28] sm:$0xf]
    %v325 = vld [vmem:[#allocation7 + $0x2c] sm:$0xf]
    %v326 = vld [vmem:[#allocation7 + $0x30] sm:$0xf]
    %v327 = vld [vmem:[#allocation7 + $0x34] sm:$0xf]
    %v328 = vld [vmem:[#allocation7 + $0x38] sm:$0xf]
    %v329 = vld [vmem:[#allocation7 + $0x3c] sm:$0xf]
    %v330 = vld [vmem:[%s8] sm:$0x1]
    %v332 = vlaneseq
    %v333 = vshrl.u32 %v332, 7
    %v334 = vsub.s32 0, %v333
    %v335 = vrot.slane %v330, %v334
    %v353 = vunpack.c.l.b16 %v314
    %v354 = vunpack.c.l.b16 %v315
    %v355 = vunpack.c.l.b16 %v316
    %v356 = vunpack.c.l.b16 %v317
    %v357 = vunpack.c.l.b16 %v318
    %v358 = vunpack.c.l.b16 %v319
    %v359 = vunpack.c.l.b16 %v320
    %v360 = vunpack.c.l.b16 %v321
    %v361 = vunpack.c.l.b16 %v322
    %v362 = vunpack.c.l.b16 %v323
    %v363 = vunpack.c.l.b16 %v324
    %v364 = vunpack.c.l.b16 %v325
    %v365 = vunpack.c.l.b16 %v326
    %v366 = vunpack.c.l.b16 %v327
    %v367 = vunpack.c.l.b16 %v328
    %v368 = vunpack.c.l.b16 %v329
    %v369 = vpack.c.b16 %v354, %v353
    %v370 = vpack.c.b16 %v356, %v355
    %v371 = vpack.c.b16 %v358, %v357
    %v372 = vpack.c.b16 %v360, %v359
    %v373 = vpack.c.b16 %v362, %v361
    %v374 = vpack.c.b16 %v364, %v363
    %v375 = vpack.c.b16 %v366, %v365
    %v376 = vpack.c.b16 %v368, %v367
    %385 = vmatprep.subr.bf16.mxu0 0
    %386 = vmatpush1.bf16.msra.mxu0 %v369
    %387 = vmatprep.subr.bf16.mxu0 0
    %388 = vmatpush1.bf16.msra.mxu0 %v370
    %389 = vmatprep.subr.bf16.mxu0 0
    %390 = vmatpush1.bf16.msra.mxu0 %v371
    %391 = vmatprep.subr.bf16.mxu0 0
    %392 = vmatpush1.bf16.msra.mxu0 %v372
    %393 = vmatprep.subr.bf16.mxu0 0
    %394 = vmatpush1.bf16.msra.mxu0 %v373
    %395 = vmatprep.subr.bf16.mxu0 0
    %396 = vmatpush1.bf16.msra.mxu0 %v374
    %397 = vmatprep.subr.bf16.mxu0 0
    %398 = vmatpush1.bf16.msra.mxu0 %v375
    %399 = vmatprep.subr.bf16.mxu0 0
    %400 = vmatpush1.bf16.msra.mxu0 %v376
    %401 = vmatprep.subr.bf16.mxu0 0
    %402 = vmatpush1.bf16.msra.mxu0 0
    %403 = vmatprep.subr.bf16.mxu0 0
    %404 = vmatpush1.bf16.msra.mxu0 0
    %405 = vmatprep.subr.bf16.mxu0 0
    %406 = vmatpush1.bf16.msra.mxu0 0
    %407 = vmatprep.subr.bf16.mxu0 0
    %408 = vmatpush1.bf16.msra.mxu0 0
    %409 = vmatprep.subr.bf16.mxu0 0
    %410 = vmatpush1.bf16.msra.mxu0 0
    %411 = vmatprep.subr.bf16.mxu0 0
    %412 = vmatpush1.bf16.msra.mxu0 0
    %413 = vmatprep.subr.bf16.mxu0 0
    %414 = vmatpush1.bf16.msra.mxu0 0
    %415 = vmatprep.subr.bf16.mxu0 0
    %416 = vmatpush1.bf16.msra.mxu0 0
    %417 = vmatprep.mubr.bf16.mxu0 0
    %418 = vmatmul.mubr.bf16.gmra.mrb[0].mxu0 %v313
    %v419 = vpop.f32.mrb[0].mxu0
    %v420 = vadd.f32 %v335, %v419
    %v421 = vpop.f32.mrb[0].mxu0
    %v422 = vpop.f32.mrb[0].mxu0
    %v423 = vpop.f32.mrb[0].mxu0
    %424 = vdwg.mxu0
    %v425 = vpack.c.bf16 %v420, %v420
    %426 = vst [vmem:[#allocation8] sm:$0xf] %v425
    %v427 = vld [vmem:[%s1] sm:$0x1]
    %v428 = vlaneseq
    %v429 = vshrl.u32 %v428, 7
    %v430 = vlaneseq
    %v431 = vshrl.u32 %v430, 7
    %v432 = vsub.s32 0, %v431
    %v433 = vrot.slane %v427, %v432
    %vm434 = vcmp.eq.s32.totalorder %v429, %v433
    %v435 = vsel %vm434, 1, 0
    %v436 = vcvt.s32.f32 %v435
    %p437 = scmp.eq.s32.totalorder 0, 0
    // Predicated region
    $region50: #{tpu_custom_call.1} parent=1 // pred_check
      %p438 = pneg %p437
    $region51: #{tpu_custom_call.1} parent=1 // pred_check_branch
      %440 = sbr.rel (%p438) target = $region53
    $region52: #{tpu_custom_call.1} parent=1 // pred_region
      %441 = vst [vmem:[#allocation9] sm:$0xff] 0.0
    $region53: #{tpu_custom_call.1} parent=1 // pred_fallthru
      _
    %v442 = vld [vmem:[#allocation9] sm:$0xff]
    %vm443 = vcmask 64512
    %v445 = vsel %vm443, %v436, 0
    %447 = vmatprep.subr.mxu0 0.0
    %448 = vmatpush1.msra.mxu0 %v420
    %449 = vmatprep.subr.mxu0 0.0
    %450 = vmatpush1.msra.mxu0 0.0
    %451 = vmatprep.subr.mxu0 0.0
    %452 = vmatpush1.msra.mxu0 0.0
    %453 = vmatprep.subr.mxu0 0.0
    %454 = vmatpush1.msra.mxu0 0.0
    %455 = vmatprep.subr.mxu0 0.0
    %456 = vmatpush1.msra.mxu0 0.0
    %457 = vmatprep.subr.mxu0 0.0
    %458 = vmatpush1.msra.mxu0 0.0
    %459 = vmatprep.subr.mxu0 0.0
    %460 = vmatpush1.msra.mxu0 0.0
    %461 = vmatprep.subr.mxu0 0.0
    %462 = vmatpush1.msra.mxu0 0.0
    %463 = vmatprep.subr.mxu0 0.0
    %464 = vmatpush1.msra.mxu0 0.0
    %465 = vmatprep.subr.mxu0 0.0
    %466 = vmatpush1.msra.mxu0 0.0
    %467 = vmatprep.subr.mxu0 0.0
    %468 = vmatpush1.msra.mxu0 0.0
    %469 = vmatprep.subr.mxu0 0.0
    %470 = vmatpush1.msra.mxu0 0.0
    %471 = vmatprep.subr.mxu0 0.0
    %472 = vmatpush1.msra.mxu0 0.0
    %473 = vmatprep.subr.mxu0 0.0
    %474 = vmatpush1.msra.mxu0 0.0
    %475 = vmatprep.subr.mxu0 0.0
    %476 = vmatpush1.msra.mxu0 0.0
    %477 = vmatprep.subr.mxu0 0.0
    %478 = vmatpush1.msra.mxu0 0.0
    %479 = vmatprep.subr.mxu0 0.0
    %480 = vmatpush1.msra.mxu0 0.0
    %481 = vmatprep.subr.mxu0 0.0
    %482 = vmatpush1.msra.mxu0 0.0
    %483 = vmatprep.subr.mxu0 0.0
    %484 = vmatpush1.msra.mxu0 0.0
    %485 = vmatprep.subr.mxu0 0.0
    %486 = vmatpush1.msra.mxu0 0.0
    %487 = vmatprep.subr.mxu0 0.0
    %488 = vmatpush1.msra.mxu0 0.0
    %489 = vmatprep.subr.mxu0 0.0
    %490 = vmatpush1.msra.mxu0 0.0
    %491 = vmatprep.subr.mxu0 0.0
    %492 = vmatpush1.msra.mxu0 0.0
    %493 = vmatprep.subr.mxu0 0.0
    %494 = vmatpush1.msra.mxu0 0.0
    %495 = vmatprep.subr.mxu0 0.0
    %496 = vmatpush1.msra.mxu0 0.0
    %497 = vmatprep.subr.mxu0 0.0
    %498 = vmatpush1.msra.mxu0 0.0
    %499 = vmatprep.subr.mxu0 0.0
    %500 = vmatpush1.msra.mxu0 0.0
    %501 = vmatprep.subr.mxu0 0.0
    %502 = vmatpush1.msra.mxu0 0.0
    %503 = vmatprep.subr.mxu0 0.0
    %504 = vmatpush1.msra.mxu0 0.0
    %505 = vmatprep.subr.mxu0 0.0
    %506 = vmatpush1.msra.mxu0 0.0
    %507 = vmatprep.subr.mxu0 0.0
    %508 = vmatpush1.msra.mxu0 0.0
    %509 = vmatprep.subr.mxu0 0.0
    %510 = vmatpush1.msra.mxu0 0.0
    %511 = vmatprep.mubr.f32.mxu0 0.0
    %512 = vmatmul.mubr.f32.gmra.mrb[0].mxu0 %v445
    %v513 = vpop.f32.mrb[0].mxu0
    %v514 = vadd.f32 0.0, %v513
    %v515 = vpop.f32.mrb[0].mxu0
    %516 = vdwg.mxu0
    %v517 = vadd.f32 %v442, %v514
    %518 = vst [vmem:[#allocation9] sm:$0xff] %v517
    // Predicated region
    $region54: #{tpu_custom_call.1} parent=1 // pred_check
      %p519 = pneg %p437
    $region55: #{tpu_custom_call.1} parent=1 // pred_check_branch
      %521 = sbr.rel (%p519) target = $region57
    $region56: #{tpu_custom_call.1} parent=1 // pred_region
      %v522 = vld [vmem:[#allocation9] sm:$0xff]
      %v523 = vld [vmem:[%s2] sm:$0xff]
      %525 = vset.pattern.permute.xlu0 0
      %526 = vperm.xlu0 %525, %v523
      %v527 = vpop.permute.xlu0 %526
      %v529 = vmul.f32 %v522, %v527
      %530 = vst [vmem:[#allocation9] sm:$0xff] %v529
    $region57: #{tpu_custom_call.1} parent=1 // pred_fallthru
      _
    // Predicated region
    $region58: #{tpu_custom_call.1} parent=1 // pred_check
      _
    $region59: #{tpu_custom_call.1} parent=1 // pred_check_branch
      %532 = sbr.rel (0) target = $region61
    $region60: #{tpu_custom_call.1} parent=1 // pred_region
      %s534 = ssub.s32 64, 64
      %535 = vsyncadd [#allocation4], %s534
      %s537 = sshll.u32 [#allocation8], 4
      %s538 = int_to_ptr.vmem [resolvable:$true] %s537
      %540 = dma.vmem_to_hbm [thread:$0]  %s538, 64, %s9, [#allocation4]
    $region61: #{tpu_custom_call.1} parent=1 // pred_fallthru
      _
    // Predicated region
    $region62: #{tpu_custom_call.1} parent=1 // pred_check
      _
    $region63: #{tpu_custom_call.1} parent=1 // pred_check_branch
      %542 = sbr.rel (0) target = $region65
    $region64: #{tpu_custom_call.1} parent=1 // pred_region
      %s544 = ssub.s32 128, 128
      %545 = vsyncadd [#allocation10], %s544
      %s547 = sshll.u32 [#allocation9], 4
      %s548 = int_to_ptr.vmem [resolvable:$true] %s547
      %550 = dma.vmem_to_hbm [thread:$0]  %s548, 128, %s10, [#allocation10]
    $region65: #{tpu_custom_call.1} parent=1 // pred_fallthru
      _
    // Predicated region
    $region66: #{tpu_custom_call.1} parent=1 // pred_check
      _
    $region67: #{tpu_custom_call.1} parent=1 // pred_check_branch
      %552 = sbr.rel (0) target = $region69
    $region68: #{tpu_custom_call.1} parent=1 // pred_region
      %553 = dma.done [#allocation4], 64
    $region69: #{tpu_custom_call.1} parent=1 // pred_fallthru
      _
    // Predicated region
    $region70: #{tpu_custom_call.1} parent=1 // pred_check
      _
    $region71: #{tpu_custom_call.1} parent=1 // pred_check_branch
      %555 = sbr.rel (0) target = $region73
    $region72: #{tpu_custom_call.1} parent=1 // pred_region
      %556 = dma.done [#allocation10], 128
    $region73: #{tpu_custom_call.1} parent=1 // pred_fallthru
      _
    %557 = vsyncpa [#allocation3], 1
    %558 = vsyncpa [#allocation6], 1
    %559 = vsyncpa [#allocation4], 1
    %560 = vsyncpa [#allocation10], 1

</llo_original>
